<compile_context>
chip_gen: v7x
topology: tpu7x:2x2x1
jax: 0.10.0
libtpu: 0.0.40
codegen_flags: <defaults>
</compile_context>

<pallas_src>
import functools
import math

import jax
import jax.numpy as jnp
from jax.experimental import pallas as pl
from jax.experimental.pallas import tpu as pltpu


_FF_RESIDENT_BUDGET = 24 * 1024 * 1024   # bytes of FF weights kept VMEM-resident


@functools.lru_cache(maxsize=None)
def _vmem_limit_bytes():
    cap = 64 * 1024 * 1024                       # safe fallback (v7x per-TC)
    try:
        info = pltpu.get_tpu_info()
        cap = int(getattr(info, "vmem_capacity_bytes", cap) or cap)
    except Exception:
        pass
    # leave headroom for Mosaic-internal scratch; never ask above ~112 MiB.
    return min(int(cap * 0.8), 112 * 1024 * 1024)


# ------------------------------ helpers -------------------------------------


def _round_up(x, m):
    return ((x + m - 1) // m) * m


def _pad_seq(x, target_len):
    pad = target_len - x.shape[1]
    if pad == 0:
        return x
    return jnp.pad(x, ((0, 0), (0, pad), (0, 0)))


def _pick_tile_n(B, N, tile_n):
    tn = min(tile_n, _round_up(N, 8))
    n_pad = _round_up(N, tn)
    # v7x megacore: keep >= 2 units of work on the parallel (batch, q-tile) axes.
    if B * (n_pad // tn) < 2 and N > 8:
        tn = _round_up((N + 1) // 2, 8)
    return tn


def _layernorm(x, g, b):
    mu = jnp.mean(x, axis=-1, keepdims=True)
    var = jnp.mean((x - mu) ** 2, axis=-1, keepdims=True)
    return (x - mu) * jax.lax.rsqrt(var + 1e-5) * g + b


# ----------------------------- Pallas kernels -------------------------------


def _kv_proj_kernel(ctx_ref, g_ref, b_ref, wk_ref, wv_ref, k_ref, v_ref,
                    ctxn_scr, *, normalize_ctx):
    # grid = (batch, kv_tile, head); heads innermost so the ctx tile is DMA'd
    # once per kv tile and the (optional) LayerNorm is computed once per tile.
    h = pl.program_id(2)

    @pl.when(h == 0)
    def _():
        c = ctx_ref[0].astype(jnp.float32)
        if normalize_ctx:
            c = _layernorm(c, g_ref[...], b_ref[...])
        ctxn_scr[...] = c.astype(ctxn_scr.dtype)

    c = ctxn_scr[...]
    # wk/wv are grid-resident (heads, Dc, dh); dynamic first-axis index.
    k_ref[0, 0] = jnp.dot(c, wk_ref[h],
                          preferred_element_type=jnp.float32).astype(k_ref.dtype)
    v_ref[0, 0] = jnp.dot(c, wv_ref[h],
                          preferred_element_type=jnp.float32).astype(v_ref.dtype)


def _attn_kernel(x_ref, g_ref, b_ref, wq_ref, wo_ref, bo_ref, k_ref, v_ref,
                 o_ref,
                 xn_scr, q_scr, m_scr, l_scr, acc_scr, oacc_scr,
                 *, scale, kv_len, tile_m, mask_kv, compute_dtype):
    # grid = (batch, q_tile, head, kv_tile)
    h = pl.program_id(2)
    kv = pl.program_id(3)
    last_h = pl.num_programs(2) - 1
    last_kv = pl.num_programs(3) - 1

    # Once per (batch, q-tile): fused LayerNorm of the query input + zero the
    # cross-head output accumulator.
    @pl.when(jnp.logical_and(h == 0, kv == 0))
    def _():
        xn_scr[...] = _layernorm(x_ref[0].astype(jnp.float32),
                                 g_ref[...], b_ref[...])
        oacc_scr[...] = jnp.zeros(oacc_scr.shape, jnp.float32)

    # Once per head: q projection (scale folded in) + reset online softmax.
    @pl.when(kv == 0)
    def _():
        q = jnp.dot(xn_scr[...].astype(compute_dtype), wq_ref[h],
                    preferred_element_type=jnp.float32)
        q_scr[...] = q * scale
        m_scr[...] = jnp.full(m_scr.shape, -jnp.inf, jnp.float32)
        l_scr[...] = jnp.zeros(l_scr.shape, jnp.float32)
        acc_scr[...] = jnp.zeros(acc_scr.shape, jnp.float32)

    # QK^T on the precomputed K tile.  fp32 when compute_dtype is fp32
    # (matches _ATTN_PRECISION='fp32'); bf16 MXU inputs w/ fp32 acc otherwise.
    k = k_ref[0, 0]                                                 # (tM, dh)
    s = jax.lax.dot_general(q_scr[...].astype(compute_dtype), k,
                            (((1,), (1,)), ((), ())),
                            preferred_element_type=jnp.float32)     # (tN, tM)
    if mask_kv:   # only emitted when M was actually padded
        col = kv * tile_m + jax.lax.broadcasted_iota(jnp.int32, s.shape, 1)
        s = jnp.where(col < kv_len, s, -jnp.inf)

    # Online softmax (flash-style, normalization deferred to finalize).
    m_prev = m_scr[...]
    m_new = jnp.maximum(m_prev, jnp.max(s, axis=-1, keepdims=True))
    alpha = jnp.exp(m_prev - m_new)
    p = jnp.exp(s - m_new)
    l_scr[...] = alpha * l_scr[...] + jnp.sum(p, axis=-1, keepdims=True)
    acc_scr[...] = alpha * acc_scr[...] + jnp.dot(
        p.astype(compute_dtype), v_ref[0, 0],
        preferred_element_type=jnp.float32)
    m_scr[...] = m_new

    # End of KV sweep for this head: normalize and fold this head's slice of
    # the output projection into the cross-head accumulator.
    @pl.when(kv == last_kv)
    def _():
        out_h = acc_scr[...] * pl.reciprocal(l_scr[...], approx=True)
        oacc_scr[...] += jnp.dot(out_h.astype(compute_dtype), wo_ref[h],
                                 preferred_element_type=jnp.float32)

    # Last head, last KV tile: output bias + residual, single tile write.
    @pl.when(jnp.logical_and(h == last_h, kv == last_kv))
    def _():
        o_ref[0] = (oacc_scr[...] + bo_ref[...]
                    + x_ref[0].astype(jnp.float32)).astype(o_ref.dtype)


def _geglu_ff_kernel(x_ref, g_ref, b_ref, w1_ref, b1_ref, w2_ref, b2_ref,
                     o_ref, xn_scr, acc_scr, *, compute_dtype):
    # grid = (batch, q_tile, ff_inner_tile); w1 has value|gate packed per tile.
    f = pl.program_id(2)
    last_f = pl.num_programs(2) - 1

    @pl.when(f == 0)
    def _():
        xn_scr[...] = _layernorm(x_ref[0].astype(jnp.float32),
                                 g_ref[...], b_ref[...])
        acc_scr[...] = jnp.zeros(acc_scr.shape, jnp.float32)

    xn = xn_scr[...].astype(compute_dtype)
    hidden = jnp.dot(xn, w1_ref[...],
                     preferred_element_type=jnp.float32) + b1_ref[...]
    tf = hidden.shape[-1] // 2
    a = hidden[:, :tf]
    gate = hidden[:, tf:]
    # exact GELU (matches torch.nn.functional.gelu default)
    gelu_gate = 0.5 * gate * (1.0 + jax.lax.erf(gate * (1.0 / math.sqrt(2.0))))
    y = (a * gelu_gate).astype(compute_dtype)
    acc_scr[...] += jnp.dot(y, w2_ref[...], preferred_element_type=jnp.float32)

    @pl.when(f == last_f)
    def _():
        o_ref[0] = (acc_scr[...] + b2_ref[...]
                    + x_ref[0].astype(jnp.float32)).astype(o_ref.dtype)


# ------------------------------- wrappers -----------------------------------


def cross_attention(x, ctx, gamma, beta, wq, wk, wv, wo, bo, *,
                    heads, dim_head, normalize_ctx,
                    compute_dtype=jnp.float32, tile_n=512, tile_m=1024):
    """LayerNorm + multi-head attention + out-proj + residual (2 fused kernels)."""
    B, N, D = x.shape
    _, M, Dc = ctx.shape
    scale = dim_head ** (-0.5)
    vmem = _vmem_limit_bytes()

    tn = _pick_tile_n(B, N, tile_n)
    n_pad = _round_up(N, tn)
    tm = min(tile_m, _round_up(M, 128))     # 128-multiple kv tiles -> lane-dense
    m_pad = _round_up(M, tm)
    mask_kv = m_pad != M

    xp = _pad_seq(x, n_pad)
    ctxp = _pad_seq(ctx, m_pad).astype(compute_dtype)

    # Head-major, grid-resident weights (constant index maps -> one DMA total).
    wq_r = wq.reshape(D, heads, dim_head).transpose(1, 0, 2).astype(compute_dtype)
    wk_r = wk.reshape(Dc, heads, dim_head).transpose(1, 0, 2).astype(compute_dtype)
    wv_r = wv.reshape(Dc, heads, dim_head).transpose(1, 0, 2).astype(compute_dtype)
    wo_r = wo.reshape(heads, dim_head, D).astype(compute_dtype)

    gamma2 = gamma.reshape(1, D)
    beta2 = beta.reshape(1, D)
    if normalize_ctx:
        gctx, bctx = gamma.reshape(1, Dc), beta.reshape(1, Dc)
    else:
        gctx = jnp.ones((1, Dc), jnp.float32)
        bctx = jnp.zeros((1, Dc), jnp.float32)

    # ---- 1) K/V projection (+ ctx LayerNorm), hoisted out of the q-tile loop.
    k_arr, v_arr = pl.pallas_call(
        functools.partial(_kv_proj_kernel, normalize_ctx=normalize_ctx),
        out_shape=(
            jax.ShapeDtypeStruct((B, heads, m_pad, dim_head), compute_dtype),
            jax.ShapeDtypeStruct((B, heads, m_pad, dim_head), compute_dtype)),
        grid_spec=pltpu.PrefetchScalarGridSpec(
            num_scalar_prefetch=0,
            grid=(B, m_pad // tm, heads),
            in_specs=[
                pl.BlockSpec((1, tm, Dc), lambda b, kv, h: (b, kv, 0)),           # ctx
                pl.BlockSpec((1, Dc), lambda b, kv, h: (0, 0)),                   # gamma
                pl.BlockSpec((1, Dc), lambda b, kv, h: (0, 0)),                   # beta
                pl.BlockSpec((heads, Dc, dim_head), lambda b, kv, h: (0, 0, 0)),  # wk
                pl.BlockSpec((heads, Dc, dim_head), lambda b, kv, h: (0, 0, 0)),  # wv
            ],
            out_specs=[
                pl.BlockSpec((1, 1, tm, dim_head), lambda b, kv, h: (b, h, kv, 0)),
                pl.BlockSpec((1, 1, tm, dim_head), lambda b, kv, h: (b, h, kv, 0)),
            ],
            scratch_shapes=[pltpu.VMEM((tm, Dc), compute_dtype)]),
        compiler_params=pltpu.CompilerParams(
            dimension_semantics=("parallel", "parallel", "arbitrary"),
            vmem_limit_bytes=vmem),
    )(ctxp, gctx, bctx, wk_r, wv_r)

    # ---- 2) flash attention over precomputed K/V + out-proj + bias + residual.
    kernel = functools.partial(
        _attn_kernel, scale=scale, kv_len=M, tile_m=tm, mask_kv=mask_kv,
        compute_dtype=compute_dtype)

    out = pl.pallas_call(
        kernel,
        out_shape=jax.ShapeDtypeStruct((B, n_pad, D), x.dtype),
        grid_spec=pltpu.PrefetchScalarGridSpec(
            num_scalar_prefetch=0,
            grid=(B, n_pad // tn, heads, m_pad // tm),
            in_specs=[
                pl.BlockSpec((1, tn, D), lambda b, n, h, kv: (b, n, 0)),            # x
                pl.BlockSpec((1, D), lambda b, n, h, kv: (0, 0)),                   # gamma
                pl.BlockSpec((1, D), lambda b, n, h, kv: (0, 0)),                   # beta
                pl.BlockSpec((heads, D, dim_head), lambda b, n, h, kv: (0, 0, 0)),  # wq
                pl.BlockSpec((heads, dim_head, D), lambda b, n, h, kv: (0, 0, 0)),  # wo
                pl.BlockSpec((1, D), lambda b, n, h, kv: (0, 0)),                   # bo
                pl.BlockSpec((1, 1, tm, dim_head),
                             lambda b, n, h, kv: (b, h, kv, 0)),                    # K
                pl.BlockSpec((1, 1, tm, dim_head),
                             lambda b, n, h, kv: (b, h, kv, 0)),                    # V
            ],
            out_specs=pl.BlockSpec((1, tn, D), lambda b, n, h, kv: (b, n, 0)),
            scratch_shapes=[
                pltpu.VMEM((tn, D), jnp.float32),          # LayerNorm'd q input
                pltpu.VMEM((tn, dim_head), jnp.float32),   # scaled q (per head)
                pltpu.VMEM((tn, 1), jnp.float32),          # online-softmax m
                pltpu.VMEM((tn, 1), jnp.float32),          # online-softmax l
                pltpu.VMEM((tn, dim_head), jnp.float32),   # per-head PV acc
                pltpu.VMEM((tn, D), jnp.float32),          # cross-head out acc
            ]),
        compiler_params=pltpu.CompilerParams(
            dimension_semantics=("parallel", "parallel", "arbitrary", "arbitrary"),
            vmem_limit_bytes=vmem),
    )(xp, gamma2, beta2, wq_r, wo_r, bo.reshape(1, D), k_arr, v_arr)
    return out[:, :N, :]


def geglu_ff(x, gamma, beta, w1, b1, w2, b2, *, compute_dtype=jnp.float32,
             tile_n=512, tile_f=1024):
    """Fused LayerNorm + GEGLU feed-forward + residual.

    Value|gate projections are packed into one matmul per step; weights are
    VMEM-resident (single DMA) when they fit, otherwise the ff axis is padded
    to a 128-multiple tile and streamed.
    """
    B, N, D = x.shape
    ff_inner = w2.shape[0]
    itemsize = jnp.dtype(compute_dtype).itemsize
    vmem = _vmem_limit_bytes()

    tn = _pick_tile_n(B, N, tile_n)
    n_pad = _round_up(N, tn)
    xp = _pad_seq(x, n_pad)

    if 3 * D * ff_inner * itemsize <= _FF_RESIDENT_BUDGET:
        tf = ff_inner                       # whole FF weight set stays resident
    else:
        tf = max(128, (min(tile_f, ff_inner) // 128) * 128)
    ff_pad = _round_up(ff_inner, tf)
    nf = ff_pad // tf

    wa, wg = w1[:, :ff_inner], w1[:, ff_inner:]
    ba, bg = b1[:ff_inner], b1[ff_inner:]
    w2p = w2
    if ff_pad != ff_inner:                  # zero-pad ff axis; padded cols contribute 0
        pad = ff_pad - ff_inner
        wa = jnp.pad(wa, ((0, 0), (0, pad)))
        wg = jnp.pad(wg, ((0, 0), (0, pad)))
        ba = jnp.pad(ba, ((0, pad),))
        bg = jnp.pad(bg, ((0, pad),))
        w2p = jnp.pad(w2, ((0, pad), (0, 0)))

    # Pack value|gate columns per f-tile -> one (tn,D)x(D,2*tf) matmul per step.
    w1p = jnp.concatenate([wa.reshape(D, nf, tf), wg.reshape(D, nf, tf)], axis=2)
    w1p = w1p.reshape(D, nf * 2 * tf).astype(compute_dtype)
    b1p = jnp.concatenate([ba.reshape(nf, tf), bg.reshape(nf, tf)], axis=1)
    b1p = b1p.reshape(1, nf * 2 * tf)
    w2c = w2p.astype(compute_dtype)

    kernel = functools.partial(_geglu_ff_kernel, compute_dtype=compute_dtype)
    out = pl.pallas_call(
        kernel,
        out_shape=jax.ShapeDtypeStruct((B, n_pad, D), x.dtype),
        grid_spec=pltpu.PrefetchScalarGridSpec(
            num_scalar_prefetch=0,
            grid=(B, n_pad // tn, nf),
            in_specs=[
                pl.BlockSpec((1, tn, D), lambda b, n, f: (b, n, 0)),   # x
                pl.BlockSpec((1, D), lambda b, n, f: (0, 0)),          # gamma
                pl.BlockSpec((1, D), lambda b, n, f: (0, 0)),          # beta
                pl.BlockSpec((D, 2 * tf), lambda b, n, f: (0, f)),     # w1 (value|gate)
                pl.BlockSpec((1, 2 * tf), lambda b, n, f: (0, f)),     # b1 (value|gate)
                pl.BlockSpec((tf, D), lambda b, n, f: (f, 0)),         # w2
                pl.BlockSpec((1, D), lambda b, n, f: (0, 0)),          # b2
            ],
            out_specs=pl.BlockSpec((1, tn, D), lambda b, n, f: (b, n, 0)),
            scratch_shapes=[
                pltpu.VMEM((tn, D), jnp.float32),   # norm'd input tile
                pltpu.VMEM((tn, D), jnp.float32),   # output accumulator
            ]),
        compiler_params=pltpu.CompilerParams(
            dimension_semantics=("parallel", "parallel", "arbitrary"),
            vmem_limit_bytes=vmem),
    )(xp, gamma.reshape(1, D), beta.reshape(1, D), w1p, b1p, w2c,
      b2.reshape(1, D))
    return out[:, :N, :]


def basic_transformer_block(x, context, params, *, heads, dim_head,
                            compute_dtype=jnp.float32):
    # attn1: self-attention; norm1 + residual fused (disable_self_attn=False).
    x = cross_attention(x, x, params["ln1_g"], params["ln1_b"],
                        params["wq1"], params["wk1"], params["wv1"],
                        params["wo1"], params["bo1"],
                        heads=heads, dim_head=dim_head,
                        normalize_ctx=True, compute_dtype=compute_dtype)
    # attn2: cross-attention with external context (falls back to norm2(x)).
    if context is None:
        x = cross_attention(x, x, params["ln2_g"], params["ln2_b"],
                            params["wq2"], params["wk2"], params["wv2"],
                            params["wo2"], params["bo2"],
                            heads=heads, dim_head=dim_head,
                            normalize_ctx=True, compute_dtype=compute_dtype)
    else:
        x = cross_attention(x, context, params["ln2_g"], params["ln2_b"],
                            params["wq2"], params["wk2"], params["wv2"],
                            params["wo2"], params["bo2"],
                            heads=heads, dim_head=dim_head,
                            normalize_ctx=False, compute_dtype=compute_dtype)
    # gated (GEGLU) feed-forward with norm3 + residual fused
    x = geglu_ff(x, params["ln3_g"], params["ln3_b"],
                 params["ff_w1"], params["ff_b1"],
                 params["ff_w2"], params["ff_b2"],
                 compute_dtype=compute_dtype)
    return x


# ------------------------- pure-JAX reference (check) -----------------------


def _ref_layernorm(x, g, b):
    mean = jnp.mean(x, axis=-1, keepdims=True)
    var = jnp.mean((x - mean) ** 2, axis=-1, keepdims=True)
    return (x - mean) * jax.lax.rsqrt(var + 1e-5) * g + b


def _ref_attn(xq, ctx, wq, wk, wv, wo, bo, heads, dim_head):
    B, N, _ = xq.shape
    M = ctx.shape[1]
    q = xq @ wq
    k = ctx @ wk
    v = ctx @ wv
    q = q.reshape(B, N, heads, dim_head).transpose(0, 2, 1, 3)
    k = k.reshape(B, M, heads, dim_head).transpose(0, 2, 1, 3)
    v = v.reshape(B, M, heads, dim_head).transpose(0, 2, 1, 3)
    sim = jnp.einsum("bhid,bhjd->bhij", q, k) * dim_head ** (-0.5)
    p = jax.nn.softmax(sim, axis=-1)
    o = jnp.einsum("bhij,bhjd->bhid", p, v)
    o = o.transpose(0, 2, 1, 3).reshape(B, N, heads * dim_head)
    return o @ wo + bo


def _ref_block(x, context, params, heads, dim_head):
    xn1 = _ref_layernorm(x, params["ln1_g"], params["ln1_b"])
    x = _ref_attn(xn1, xn1, params["wq1"], params["wk1"], params["wv1"],
                  params["wo1"], params["bo1"], heads, dim_head) + x
    xn2 = _ref_layernorm(x, params["ln2_g"], params["ln2_b"])
    ctx = xn2 if context is None else context
    x = _ref_attn(xn2, ctx, params["wq2"], params["wk2"], params["wv2"],
                  params["wo2"], params["bo2"], heads, dim_head) + x
    xn3 = _ref_layernorm(x, params["ln3_g"], params["ln3_b"])
    h = xn3 @ params["ff_w1"] + params["ff_b1"]
    ff_inner = params["ff_w2"].shape[0]
    a, gate = h[..., :ff_inner], h[..., ff_inner:]
    y = a * (0.5 * gate * (1.0 + jax.lax.erf(gate / jnp.sqrt(2.0))))
    return y @ params["ff_w2"] + params["ff_b2"] + x


# ----------------------------------- main ------------------------------------


if __name__ == "__main__":
    # small, module-consistent shapes
    B, N, M = 2, 8, 12
    dim, n_heads, d_head = 32, 4, 8          # inner_dim = 32
    context_dim = 16
    ff_inner = dim * 4                        # 128 (gated_ff=True -> GEGLU)
    inner = n_heads * d_head

    key = jax.random.PRNGKey(0)
    ks = jax.random.split(key, 20)

    def w(k, shape, s=0.05):
        return (s * jax.random.normal(k, shape)).astype(jnp.float32)

    params = {
        # norms
        "ln1_g": jnp.ones((dim,), jnp.float32), "ln1_b": jnp.zeros((dim,), jnp.float32),
        "ln2_g": jnp.ones((dim,), jnp.float32), "ln2_b": jnp.zeros((dim,), jnp.float32),
        "ln3_g": jnp.ones((dim,), jnp.float32), "ln3_b": jnp.zeros((dim,), jnp.float32),
        # attn1 (self)
        "wq1": w(ks[0], (dim, inner)), "wk1": w(ks[1], (dim, inner)),
        "wv1": w(ks[2], (dim, inner)), "wo1": w(ks[3], (inner, dim)),
        "bo1": w(ks[4], (dim,)),
        # attn2 (cross)
        "wq2": w(ks[5], (dim, inner)), "wk2": w(ks[6], (context_dim, inner)),
        "wv2": w(ks[7], (context_dim, inner)), "wo2": w(ks[8], (inner, dim)),
        "bo2": w(ks[9], (dim,)),
        # GEGLU feed-forward
        "ff_w1": w(ks[10], (dim, 2 * ff_inner)), "ff_b1": w(ks[11], (2 * ff_inner,)),
        "ff_w2": w(ks[12], (ff_inner, dim)), "ff_b2": w(ks[13], (dim,)),
    }

    x = jax.random.normal(ks[14], (B, N, dim), jnp.float32)
    context = jax.random.normal(ks[15], (B, M, context_dim), jnp.float32)

    ref = _ref_block(x, context, params, n_heads, d_head)

    # fp32 MXU path (strict check against the reference semantics)
    out = basic_transformer_block(x, context, params, heads=n_heads,
                                  dim_head=d_head, compute_dtype=jnp.float32)
    out = jax.block_until_ready(out)
    assert out.shape == (B, N, dim)
    err = float(jnp.max(jnp.abs(out - ref)))
    assert jnp.allclose(out, ref, atol=2e-3, rtol=2e-3), err

    # bf16 MXU path (production config on v6e/v7x); looser tolerance
    out_bf16 = basic_transformer_block(x, context, params, heads=n_heads,
                                       dim_head=d_head,
                                       compute_dtype=jnp.bfloat16)
    out_bf16 = jax.block_until_ready(out_bf16)
    err_bf16 = float(jnp.max(jnp.abs(out_bf16 - ref)))
    assert jnp.allclose(out_bf16, ref, atol=5e-2, rtol=5e-2), err_bf16

    print("KERNEL_OK")
</pallas_src>

<mosaic_0001>
module attributes {stable_mosaic.version = 11 : i64} {
  func.func @_kv_proj_kernel(%arg0: i32, %arg1: i32, %arg2: i32, %arg3: memref<1x128x32xf32, #tpu.memory_space<vmem>>, %arg4: memref<1x32xf32, #tpu.memory_space<vmem>>, %arg5: memref<1x32xf32, #tpu.memory_space<vmem>>, %arg6: memref<4x32x8xf32, #tpu.memory_space<vmem>>, %arg7: memref<4x32x8xf32, #tpu.memory_space<vmem>>, %arg8: memref<1x1x128x8xf32, #tpu.memory_space<vmem>>, %arg9: memref<1x1x128x8xf32, #tpu.memory_space<vmem>>, %arg10: memref<128x32xf32, #tpu.memory_space<vmem>>) attributes {dimension_semantics = [#tpu.dimension_semantics<parallel>, #tpu.dimension_semantics<parallel>, #tpu.dimension_semantics<arbitrary>], iteration_bounds = array<i64: 2, 1, 4>, scalar_prefetch = 0 : i64, scratch_operands = 1 : i64, tpu.core_type = #tpu.core_type<tc>, window_params = [{transform_indices = @transform_0, window_bounds = array<i64: 1, 128, 32>}, {pipeline_mode = #tpu.pipeline_mode<synchronous>, transform_indices = @transform_1, window_bounds = array<i64: 1, 32>}, {pipeline_mode = #tpu.pipeline_mode<synchronous>, transform_indices = @transform_2, window_bounds = array<i64: 1, 32>}, {pipeline_mode = #tpu.pipeline_mode<synchronous>, transform_indices = @transform_3, window_bounds = array<i64: 4, 32, 8>}, {pipeline_mode = #tpu.pipeline_mode<synchronous>, transform_indices = @transform_4, window_bounds = array<i64: 4, 32, 8>}, {transform_indices = @transform_5, window_bounds = array<i64: 1, 1, 128, 8>}, {transform_indices = @transform_6, window_bounds = array<i64: 1, 1, 128, 8>}]} {
    %c0_i32 = arith.constant 0 : i32
    %0 = arith.cmpi eq, %arg2, %c0_i32 : i32
    %1 = arith.extui %0 : i1 to i32
    %c0_i32_0 = arith.constant 0 : i32
    %2 = arith.cmpi ne, %1, %c0_i32_0 : i32
    scf.if %2 {
      %c0_15 = arith.constant 0 : index
      %c0_16 = arith.constant 0 : index
      %c0_17 = arith.constant 0 : index
      %18 = vector.load %arg3[%c0_15, %c0_16, %c0_17] : memref<1x128x32xf32, #tpu.memory_space<vmem>>, vector<1x128x32xf32>
      %19 = vector.shape_cast %18 : vector<1x128x32xf32> to vector<128x32xf32>
      %c0_18 = arith.constant 0 : index
      %c0_19 = arith.constant 0 : index
      %20 = vector.load %arg4[%c0_18, %c0_19] : memref<1x32xf32, #tpu.memory_space<vmem>>, vector<1x32xf32>
      %c0_20 = arith.constant 0 : index
      %c0_21 = arith.constant 0 : index
      %21 = vector.load %arg5[%c0_20, %c0_21] : memref<1x32xf32, #tpu.memory_space<vmem>>, vector<1x32xf32>
      %cst_22 = arith.constant dense<0.000000e+00> : vector<128xf32>
      %22 = vector.multi_reduction <add>, %19, %cst_22 [1] : vector<128x32xf32> to vector<128xf32>
      %23 = vector.shape_cast %22 : vector<128xf32> to vector<128x1xf32>
      %cst_23 = arith.constant 3.200000e+01 : f32
      %24 = vector.broadcast %cst_23 : f32 to vector<128x1xf32>
      %25 = arith.divf %23, %24 : vector<128x1xf32>
      %26 = vector.broadcast %25 : vector<128x1xf32> to vector<128x32xf32>
      %27 = arith.subf %19, %26 : vector<128x32xf32>
      %28 = arith.mulf %27, %27 : vector<128x32xf32>
      %cst_24 = arith.constant dense<0.000000e+00> : vector<128xf32>
      %29 = vector.multi_reduction <add>, %28, %cst_24 [1] : vector<128x32xf32> to vector<128xf32>
      %30 = vector.shape_cast %29 : vector<128xf32> to vector<128x1xf32>
      %cst_25 = arith.constant 3.200000e+01 : f32
      %31 = vector.broadcast %cst_25 : f32 to vector<128x1xf32>
      %32 = arith.divf %30, %31 : vector<128x1xf32>
      %33 = vector.broadcast %25 : vector<128x1xf32> to vector<128x32xf32>
      %34 = arith.subf %19, %33 : vector<128x32xf32>
      %cst_26 = arith.constant 9.99999974E-6 : f32
      %35 = vector.broadcast %cst_26 : f32 to vector<128x1xf32>
      %36 = arith.addf %32, %35 : vector<128x1xf32>
      %37 = math.rsqrt %36 : vector<128x1xf32>
      %38 = vector.broadcast %37 : vector<128x1xf32> to vector<128x32xf32>
      %39 = arith.mulf %34, %38 : vector<128x32xf32>
      %40 = vector.broadcast %20 : vector<1x32xf32> to vector<128x32xf32>
      %41 = arith.mulf %39, %40 : vector<128x32xf32>
      %42 = vector.broadcast %21 : vector<1x32xf32> to vector<128x32xf32>
      %43 = arith.addf %41, %42 : vector<128x32xf32>
      %c0_27 = arith.constant 0 : index
      %c0_28 = arith.constant 0 : index
      %44 = vector.load %arg10[%c0_27, %c0_28] : memref<128x32xf32, #tpu.memory_space<vmem>>, vector<128x32xf32>
      tpu.vector_store %arg10[%c0_27, %c0_28], %43 {strides = array<i32>} : memref<128x32xf32, #tpu.memory_space<vmem>>, vector<128x32xf32>,
    } else {
    }
    %c0 = arith.constant 0 : index
    %c0_1 = arith.constant 0 : index
    %3 = vector.load %arg10[%c0, %c0_1] : memref<128x32xf32, #tpu.memory_space<vmem>>, vector<128x32xf32>
    %4 = arith.index_cast %arg2 : i32 to index
    %c0_2 = arith.constant 0 : index
    %c0_3 = arith.constant 0 : index
    %5 = vector.load %arg6[%4, %c0_2, %c0_3] : memref<4x32x8xf32, #tpu.memory_space<vmem>>, vector<1x32x8xf32>
    %6 = vector.shape_cast %5 : vector<1x32x8xf32> to vector<32x8xf32>
    %cst = arith.constant dense<0.000000e+00> : vector<128x8xf32>
    %7 = tpu.matmul %3, %6, %cst {dimension_numbers = #tpu.dot_dimension_numbers<[1], [0], [0], [1], [0, 0, 1, 1], [], []>} : vector<128x32xf32>, vector<32x8xf32>, vector<128x8xf32> -> vector<128x8xf32>
    %c0_4 = arith.constant 0 : index
    %c0_5 = arith.constant 0 : index
    %c0_6 = arith.constant 0 : index
    %c0_7 = arith.constant 0 : index
    %8 = vector.load %arg8[%c0_4, %c0_5, %c0_6, %c0_7] : memref<1x1x128x8xf32, #tpu.memory_space<vmem>>, vector<1x1x128x8xf32>
    %9 = vector.shape_cast %8 : vector<1x1x128x8xf32> to vector<128x8xf32>
    %10 = vector.shape_cast %7 : vector<128x8xf32> to vector<1x1x128x8xf32>
    tpu.vector_store %arg8[%c0_4, %c0_5, %c0_6, %c0_7], %10 {strides = array<i32>} : memref<1x1x128x8xf32, #tpu.memory_space<vmem>>, vector<1x1x128x8xf32>,
    %11 = arith.index_cast %arg2 : i32 to index
    %c0_8 = arith.constant 0 : index
    %c0_9 = arith.constant 0 : index
    %12 = vector.load %arg7[%11, %c0_8, %c0_9] : memref<4x32x8xf32, #tpu.memory_space<vmem>>, vector<1x32x8xf32>
    %13 = vector.shape_cast %12 : vector<1x32x8xf32> to vector<32x8xf32>
    %cst_10 = arith.constant dense<0.000000e+00> : vector<128x8xf32>
    %14 = tpu.matmul %3, %13, %cst_10 {dimension_numbers = #tpu.dot_dimension_numbers<[1], [0], [0], [1], [0, 0, 1, 1], [], []>} : vector<128x32xf32>, vector<32x8xf32>, vector<128x8xf32> -> vector<128x8xf32>
    %c0_11 = arith.constant 0 : index
    %c0_12 = arith.constant 0 : index
    %c0_13 = arith.constant 0 : index
    %c0_14 = arith.constant 0 : index
    %15 = vector.load %arg9[%c0_11, %c0_12, %c0_13, %c0_14] : memref<1x1x128x8xf32, #tpu.memory_space<vmem>>, vector<1x1x128x8xf32>
    %16 = vector.shape_cast %15 : vector<1x1x128x8xf32> to vector<128x8xf32>
    %17 = vector.shape_cast %14 : vector<128x8xf32> to vector<1x1x128x8xf32>
    tpu.vector_store %arg9[%c0_11, %c0_12, %c0_13, %c0_14], %17 {strides = array<i32>} : memref<1x1x128x8xf32, #tpu.memory_space<vmem>>, vector<1x1x128x8xf32>,
    return
  }
  func.func @transform_0(%arg0: i32, %arg1: i32, %arg2: i32) -> (i32, i32, i32) {
    %c0_i32 = arith.constant 0 : i32
    %c0_i32_0 = arith.constant 0 : i32
    return %arg0, %arg1, %c0_i32 : i32, i32, i32
  }
  func.func @transform_1(%arg0: i32, %arg1: i32, %arg2: i32) -> (i32, i32) {
    %c0_i32 = arith.constant 0 : i32
    %c0_i32_0 = arith.constant 0 : i32
    %c0_i32_1 = arith.constant 0 : i32
    return %c0_i32, %c0_i32_0 : i32, i32
  }
  func.func @transform_2(%arg0: i32, %arg1: i32, %arg2: i32) -> (i32, i32) {
    %c0_i32 = arith.constant 0 : i32
    %c0_i32_0 = arith.constant 0 : i32
    %c0_i32_1 = arith.constant 0 : i32
    return %c0_i32, %c0_i32_0 : i32, i32
  }
  func.func @transform_3(%arg0: i32, %arg1: i32, %arg2: i32) -> (i32, i32, i32) {
    %c0_i32 = arith.constant 0 : i32
    %c0_i32_0 = arith.constant 0 : i32
    %c0_i32_1 = arith.constant 0 : i32
    %c0_i32_2 = arith.constant 0 : i32
    return %c0_i32, %c0_i32_0, %c0_i32_1 : i32, i32, i32
  }
  func.func @transform_4(%arg0: i32, %arg1: i32, %arg2: i32) -> (i32, i32, i32) {
    %c0_i32 = arith.constant 0 : i32
    %c0_i32_0 = arith.constant 0 : i32
    %c0_i32_1 = arith.constant 0 : i32
    %c0_i32_2 = arith.constant 0 : i32
    return %c0_i32, %c0_i32_0, %c0_i32_1 : i32, i32, i32
  }
  func.func @transform_5(%arg0: i32, %arg1: i32, %arg2: i32) -> (i32, i32, i32, i32) {
    %c0_i32 = arith.constant 0 : i32
    %c0_i32_0 = arith.constant 0 : i32
    return %arg0, %arg2, %arg1, %c0_i32 : i32, i32, i32, i32
  }
  func.func @transform_6(%arg0: i32, %arg1: i32, %arg2: i32) -> (i32, i32, i32, i32) {
    %c0_i32 = arith.constant 0 : i32
    %c0_i32_0 = arith.constant 0 : i32
    return %arg0, %arg2, %arg1, %c0_i32 : i32, i32, i32, i32
  }
}

</mosaic_0001>

<llo_original>
// kernel: tpu_custom_call.1
$region0: #{tpu_custom_call.1}
  #allocation0 [shape = 'u32[]', space=smem, size = 0x4, offset = 0x4, fixed_abs, tag = 'smem constant byte address 0x4 - core index']
  #allocation1 [shape = 'u32[144,128]{1,0:T(1,128)}', space=vmem, size = 0x12000, scoped, tag = 'internal scratch']
  #allocation2 [shape = 'f32[128,32]{1,0:T(8,128)}', space=vmem, size = 0x10000, scoped, tag = 'scratch operand']
  %s0 = inlined_call_operand.vmem [shape: f32[2,128,32], index: 0, kind: input, shape index: {}]
  %s1 = inlined_call_operand.vmem [shape: f32[1,32], index: 1, kind: input, shape index: {}]
  %s2 = inlined_call_operand.vmem [shape: f32[1,32], index: 2, kind: input, shape index: {}]
  %s3 = inlined_call_operand.vmem [shape: f32[4,32,8], index: 3, kind: input, shape index: {}]
  %s4 = inlined_call_operand.vmem [shape: f32[4,32,8], index: 4, kind: input, shape index: {}]
  %s5 = inlined_call_operand.vmem [shape: f32[2,4,128,8], index: 5, kind: output, shape index: {0}]
  %s6 = inlined_call_operand.vmem [shape: f32[2,4,128,8], index: 6, kind: output, shape index: {1}]
  %7 = xla_tuple %s5, %s6
  %s8 = sld [smem:[#allocation0]]
  $region65: #{tpu_custom_call.1} parent=0
    _
  %s10 = ssub.s32 1, %s8
  %s11 = scalar_select 0, %s10, %s8
  loop: start=0, step=1, limit=10
  $region2: #{tpu_custom_call.1} parent=0 // loop_pre_header
    _
  $region3: #{tpu_custom_call.1} parent=0 // loop_header
    %s13 = sphi 0, %s17
    %p14 = scmp.ge.s32.totalorder %s13, 10
    %s20 = sphi 0, %s39
    %s21 = sphi 0, %s35
    %s22 = sphi 0, %s31
    %s23 = sphi 0, %s20
    %s24 = sphi 0, %s21
    %s25 = sphi 0, %s22
    %s26 = sphi 0, %s23
    %s27 = sphi 0, %s24
    %s28 = sphi 0, %s25
    %s44 = sphi 0, %s46
    %s47 = sphi 0, %s44
    %s48 = sphi 0, %s47
    %s64 = sphi 0, %s48
    %s68 = sphi 0, %s68
    %s70 = sphi 0, %s68
    %s71 = sphi 0, %s70
    %s85 = sphi 0, %s71
    %s89 = sphi 0, %s89
    %s91 = sphi 0, %s89
    %s92 = sphi 0, %s91
    %s106 = sphi 0, %s92
    %s110 = sphi 0, %s110
    %s112 = sphi 0, %s110
    %s113 = sphi 0, %s112
    %s127 = sphi 0, %s113
    %s131 = sphi 0, %s131
    %s133 = sphi 0, %s131
    %s134 = sphi 0, %s133
    %s148 = sphi 0, %s134
    %s158 = sphi 0, %s160
    %s161 = sphi 0, %s158
    %s162 = sphi 0, %s161
    %s178 = sphi 0, %s162
    %s188 = sphi 0, %s190
    %s191 = sphi 0, %s188
    %s192 = sphi 0, %s191
    %s208 = sphi 0, %s192
  $region4: #{tpu_custom_call.1} parent=0 // loop_header_branch
    %16 = sbr.rel (%p14) target = $region8
  $region5: #{tpu_custom_call.1} parent=0 // loop_body
    %s18 = ssub.s32 %s13, 1
    %s19 = ssub.s32 %s13, 2
    %s29 = sadd.s32 1, %s22
    %p30 = scmp.ge.s32.totalorder %s29, 4
    %s31 = scalar_select %p30, 0, %s29
    %s32 = sadd.s32 1, %s21
    %s33 = scalar_select %p30, %s32, %s21
    %p34 = scmp.ge.s32.totalorder %s33, 1
    %s35 = scalar_select %p34, 0, %s33
    %s36 = sadd.s32 1, %s20
    %s37 = scalar_select %p34, %s36, %s20
    %p38 = scmp.ge.s32.totalorder %s37, 2
    %s39 = scalar_select %p38, 0, %s37
    %s40 = ssub.s32 %s20, %s39
    %s41 = ssub.s32 %s21, %s35
    %s42 = sor.u32 %s40, %s41
    %p43 = scmp.eq.s32.totalorder %s42, 0
    %s45 = sadd.s32 %s44, 1
    %s46 = scalar_select %p43, %s44, %s45
    %p49 = pneg %p43
    %p50 = scmp.eq.s32.totalorder %s13, 7
    %p51 = por %p49, %p50
    %p52 = scmp.ne.s32.totalorder %s44, %s47
    %p53 = scmp.eq.s32.totalorder %s13, 0
    %p54 = por %p52, %p53
    %p55 = scmp.ne.s32.totalorder %s44, %s47
    %p56 = scmp.eq.s32.totalorder %s18, 7
    %p57 = por %p55, %p56
    %p58 = scmp.ne.s32.totalorder %s47, %s48
    %p59 = scmp.eq.s32.totalorder %s18, 0
    %p60 = por %p58, %p59
    %p61 = scmp.ne.s32.totalorder %s47, %s48
    %p62 = scmp.eq.s32.totalorder %s19, 7
    %p63 = por %p61, %p62
    %p65 = scmp.ne.s32.totalorder %s48, %s64
    %p66 = scmp.eq.s32.totalorder %s19, 0
    %p67 = por %p65, %p66
    %s69 = sadd.s32 %s68, 1
    %p72 = scmp.eq.s32.totalorder %s13, 7
    %p73 = scmp.ne.s32.totalorder %s68, %s70
    %p74 = scmp.eq.s32.totalorder %s13, 0
    %p75 = por %p73, %p74
    %p76 = scmp.ne.s32.totalorder %s68, %s70
    %p77 = scmp.eq.s32.totalorder %s18, 7
    %p78 = por %p76, %p77
    %p79 = scmp.ne.s32.totalorder %s70, %s71
    %p80 = scmp.eq.s32.totalorder %s18, 0
    %p81 = por %p79, %p80
    %p82 = scmp.ne.s32.totalorder %s70, %s71
    %p83 = scmp.eq.s32.totalorder %s19, 7
    %p84 = por %p82, %p83
    %p86 = scmp.ne.s32.totalorder %s71, %s85
    %p87 = scmp.eq.s32.totalorder %s19, 0
    %p88 = por %p86, %p87
    %s90 = sadd.s32 %s89, 1
    %p93 = scmp.eq.s32.totalorder %s13, 7
    %p94 = scmp.ne.s32.totalorder %s89, %s91
    %p95 = scmp.eq.s32.totalorder %s13, 0
    %p96 = por %p94, %p95
    %p97 = scmp.ne.s32.totalorder %s89, %s91
    %p98 = scmp.eq.s32.totalorder %s18, 7
    %p99 = por %p97, %p98
    %p100 = scmp.ne.s32.totalorder %s91, %s92
    %p101 = scmp.eq.s32.totalorder %s18, 0
    %p102 = por %p100, %p101
    %p103 = scmp.ne.s32.totalorder %s91, %s92
    %p104 = scmp.eq.s32.totalorder %s19, 7
    %p105 = por %p103, %p104
    %p107 = scmp.ne.s32.totalorder %s92, %s106
    %p108 = scmp.eq.s32.totalorder %s19, 0
    %p109 = por %p107, %p108
    %s111 = sadd.s32 %s110, 1
    %p114 = scmp.eq.s32.totalorder %s13, 7
    %p115 = scmp.ne.s32.totalorder %s110, %s112
    %p116 = scmp.eq.s32.totalorder %s13, 0
    %p117 = por %p115, %p116
    %p118 = scmp.ne.s32.totalorder %s110, %s112
    %p119 = scmp.eq.s32.totalorder %s18, 7
    %p120 = por %p118, %p119
    %p121 = scmp.ne.s32.totalorder %s112, %s113
    %p122 = scmp.eq.s32.totalorder %s18, 0
    %p123 = por %p121, %p122
    %p124 = scmp.ne.s32.totalorder %s112, %s113
    %p125 = scmp.eq.s32.totalorder %s19, 7
    %p126 = por %p124, %p125
    %p128 = scmp.ne.s32.totalorder %s113, %s127
    %p129 = scmp.eq.s32.totalorder %s19, 0
    %p130 = por %p128, %p129
    %s132 = sadd.s32 %s131, 1
    %p135 = scmp.eq.s32.totalorder %s13, 7
    %p136 = scmp.ne.s32.totalorder %s131, %s133
    %p137 = scmp.eq.s32.totalorder %s13, 0
    %p138 = por %p136, %p137
    %p139 = scmp.ne.s32.totalorder %s131, %s133
    %p140 = scmp.eq.s32.totalorder %s18, 7
    %p141 = por %p139, %p140
    %p142 = scmp.ne.s32.totalorder %s133, %s134
    %p143 = scmp.eq.s32.totalorder %s18, 0
    %p144 = por %p142, %p143
    %p145 = scmp.ne.s32.totalorder %s133, %s134
    %p146 = scmp.eq.s32.totalorder %s19, 7
    %p147 = por %p145, %p146
    %p149 = scmp.ne.s32.totalorder %s134, %s148
    %p150 = scmp.eq.s32.totalorder %s19, 0
    %p151 = por %p149, %p150
    %s152 = ssub.s32 %s20, %s39
    %s153 = ssub.s32 %s22, %s31
    %s154 = sor.u32 %s152, %s153
    %s155 = ssub.s32 %s21, %s35
    %s156 = sor.u32 %s154, %s155
    %p157 = scmp.eq.s32.totalorder %s156, 0
    %s159 = sadd.s32 %s158, 1
    %s160 = scalar_select %p157, %s158, %s159
    %p163 = pneg %p157
    %p164 = scmp.eq.s32.totalorder %s13, 7
    %p165 = por %p163, %p164
    %p166 = scmp.ne.s32.totalorder %s158, %s161
    %p167 = scmp.eq.s32.totalorder %s13, 0
    %p168 = por %p166, %p167
    %p169 = scmp.ne.s32.totalorder %s158, %s161
    %p170 = scmp.eq.s32.totalorder %s18, 7
    %p171 = por %p169, %p170
    %p172 = scmp.ne.s32.totalorder %s161, %s162
    %p173 = scmp.eq.s32.totalorder %s18, 0
    %p174 = por %p172, %p173
    %p175 = scmp.ne.s32.totalorder %s161, %s162
    %p176 = scmp.eq.s32.totalorder %s19, 7
    %p177 = por %p175, %p176
    %p179 = scmp.ne.s32.totalorder %s162, %s178
    %p180 = scmp.eq.s32.totalorder %s19, 0
    %p181 = por %p179, %p180
    %s182 = ssub.s32 %s20, %s39
    %s183 = ssub.s32 %s22, %s31
    %s184 = sor.u32 %s182, %s183
    %s185 = ssub.s32 %s21, %s35
    %s186 = sor.u32 %s184, %s185
    %p187 = scmp.eq.s32.totalorder %s186, 0
    %s189 = sadd.s32 %s188, 1
    %s190 = scalar_select %p187, %s188, %s189
    %p193 = pneg %p187
    %p194 = scmp.eq.s32.totalorder %s13, 7
    %p195 = por %p193, %p194
    %p196 = scmp.ne.s32.totalorder %s188, %s191
    %p197 = scmp.eq.s32.totalorder %s13, 0
    %p198 = por %p196, %p197
    %p199 = scmp.ne.s32.totalorder %s188, %s191
    %p200 = scmp.eq.s32.totalorder %s18, 7
    %p201 = por %p199, %p200
    %p202 = scmp.ne.s32.totalorder %s191, %s192
    %p203 = scmp.eq.s32.totalorder %s18, 0
    %p204 = por %p202, %p203
    %p205 = scmp.ne.s32.totalorder %s191, %s192
    %p206 = scmp.eq.s32.totalorder %s19, 7
    %p207 = por %p205, %p206
    %p209 = scmp.ne.s32.totalorder %s192, %s208
    %p210 = scmp.eq.s32.totalorder %s19, 0
    %p211 = por %p209, %p210
    %p212 = scmp.le.s32.totalorder 1, %s13
    %p213 = scmp.lt.s32.totalorder %s13, 9
    %p214 = pnand %p212, %p213
    %p215 = pneg %p214
    // Predicated region
    $region9: #{tpu_custom_call.1} parent=5 // pred_check
      _
    $region10: #{tpu_custom_call.1} parent=5 // pred_check_branch
      %217 = sbr.rel (%p214) target = $region12
    $region11: #{tpu_custom_call.1} parent=5 // pred_region
      %s218 = ssub.s32 %s13, 1
      // Predicated region
      $region13: #{tpu_custom_call.1} parent=11 // pred_check
        %p219 = pneg %p81
      $region14: #{tpu_custom_call.1} parent=11 // pred_check_branch
        %221 = sbr.rel (%p219) target = $region16
      $region15: #{tpu_custom_call.1} parent=11 // pred_region
        _
      $region16: #{tpu_custom_call.1} parent=11 // pred_fallthru
        _
      // Predicated region
      $region17: #{tpu_custom_call.1} parent=11 // pred_check
        %p222 = pneg %p102
      $region18: #{tpu_custom_call.1} parent=11 // pred_check_branch
        %224 = sbr.rel (%p222) target = $region20
      $region19: #{tpu_custom_call.1} parent=11 // pred_region
        _
      $region20: #{tpu_custom_call.1} parent=11 // pred_fallthru
        _
      // Predicated region
      $region21: #{tpu_custom_call.1} parent=11 // pred_check
        %p225 = pneg %p123
      $region22: #{tpu_custom_call.1} parent=11 // pred_check_branch
        %227 = sbr.rel (%p225) target = $region24
      $region23: #{tpu_custom_call.1} parent=11 // pred_region
        _
      $region24: #{tpu_custom_call.1} parent=11 // pred_fallthru
        _
      // Predicated region
      $region25: #{tpu_custom_call.1} parent=11 // pred_check
        %p228 = pneg %p144
      $region26: #{tpu_custom_call.1} parent=11 // pred_check_branch
        %230 = sbr.rel (%p228) target = $region28
      $region27: #{tpu_custom_call.1} parent=11 // pred_region
        _
      $region28: #{tpu_custom_call.1} parent=11 // pred_fallthru
        _
    $region12: #{tpu_custom_call.1} parent=5 // pred_fallthru
      _
    %p231 = scmp.lt.s32.totalorder %s13, 8
    // Predicated region
    $region29: #{tpu_custom_call.1} parent=5 // pred_check
      %p232 = pneg %p231
    $region30: #{tpu_custom_call.1} parent=5 // pred_check_branch
      %234 = sbr.rel (%p232) target = $region32
    $region31: #{tpu_custom_call.1} parent=5 // pred_region
      // Predicated region
      $region33: #{tpu_custom_call.1} parent=31 // pred_check
        %p235 = pneg %p54
      $region34: #{tpu_custom_call.1} parent=31 // pred_check_branch
        %237 = sbr.rel (%p235) target = $region36
      $region35: #{tpu_custom_call.1} parent=31 // pred_region
        %s238 = smul.u32 16, %s21
        %p239 = scmp.lt.s32.totalorder %s20, 1
        %s240 = scalar_select %p239, %s20, 1
        %p241 = scmp.lt.s32.totalorder %s238, 15
        %s242 = scalar_select %p241, %s238, 15
        %s243 = smul.addr %s240, 16
        %s244 = sadd.s32 %s242, %s243
        %s245 = smul.addr %s244, 8
        %s246 = scalar_lea.vmem %s0, %s245
        %s247 = smul.u32 16, %s21
      $region36: #{tpu_custom_call.1} parent=31 // pred_fallthru
        _
    $region32: #{tpu_custom_call.1} parent=5 // pred_fallthru
      _
    %p248 = scmp.le.s32.totalorder 1, %s13
    %p249 = scmp.lt.s32.totalorder %s13, 9
    %p250 = pnand %p248, %p249
    %p251 = pneg %p250
    // Predicated region
    $region37: #{tpu_custom_call.1} parent=5 // pred_check
      _
    $region38: #{tpu_custom_call.1} parent=5 // pred_check_branch
      %253 = sbr.rel (%p250) target = $region40
    $region39: #{tpu_custom_call.1} parent=5 // pred_region
      %s254 = ssub.s32 %s13, 1
      %s255 = smul.u32 16, %s24
      %p256 = scmp.lt.s32.totalorder %s23, 1
      %s257 = scalar_select %p256, %s23, 1
      %p258 = scmp.lt.s32.totalorder %s255, 15
      %s259 = scalar_select %p258, %s255, 15
      %s260 = smul.addr %s257, 16
      %s261 = sadd.s32 %s259, %s260
      %s262 = smul.addr %s261, 8
      %s263 = scalar_lea.vmem %s0, %s262
      %p264 = pneg %p60
      %p265 = pneg %p57
      %p266 = pneg %p81
      %p267 = pneg %p78
      %p268 = pneg %p102
      %p269 = pneg %p99
      %p270 = pneg %p123
      %p271 = pneg %p120
      %p272 = pneg %p144
      %p273 = pneg %p141
      %p274 = pneg %p174
      %p275 = pneg %p171
      %s276 = smul.u32 16, %s24
      %p277 = scmp.lt.s32.totalorder %s23, 1
      %s278 = scalar_select %p277, %s23, 1
      %p279 = scmp.lt.s32.totalorder %s25, 3
      %s280 = scalar_select %p279, %s25, 3
      %p281 = scmp.lt.s32.totalorder %s276, 15
      %s282 = scalar_select %p281, %s276, 15
      %s283 = smul.addr %s280, 16
      %s284 = sadd.s32 %s282, %s283
      %s285 = smul.addr %s278, 64
      %s286 = sadd.s32 %s284, %s285
      %s287 = smul.addr %s286, 8
      %s288 = scalar_lea.vmem %s5, %s287
      %p289 = pneg %p204
      %p290 = pneg %p201
      %s291 = smul.u32 16, %s24
      %p292 = scmp.lt.s32.totalorder %s23, 1
      %s293 = scalar_select %p292, %s23, 1
      %p294 = scmp.lt.s32.totalorder %s25, 3
      %s295 = scalar_select %p294, %s25, 3
      %p296 = scmp.lt.s32.totalorder %s291, 15
      %s297 = scalar_select %p296, %s291, 15
      %s298 = smul.addr %s295, 16
      %s299 = sadd.s32 %s297, %s298
      %s300 = smul.addr %s293, 64
      %s301 = sadd.s32 %s299, %s300
      %s302 = smul.addr %s301, 8
      %s303 = scalar_lea.vmem %s6, %s302
      %s304 = smul.u32 16, %s24
      %p305 = scmp.lt.s32.totalorder %s23, 1
      %s306 = scalar_select %p305, %s23, 1
      %p307 = scmp.lt.s32.totalorder %s304, 15
      %s308 = scalar_select %p307, %s304, 15
      %s309 = smul.addr %s306, 16
      %s310 = sadd.s32 %s308, %s309
      %s311 = smul.addr %s310, 8
      %s312 = scalar_lea.vmem %s0, %s311
      %s313 = smul.u32 16, %s24
      %s314 = smul.u32 16, %s24
      %p315 = scmp.lt.s32.totalorder %s23, 1
      %s316 = scalar_select %p315, %s23, 1
      %p317 = scmp.lt.s32.totalorder %s25, 3
      %s318 = scalar_select %p317, %s25, 3
      %p319 = scmp.lt.s32.totalorder %s314, 15
      %s320 = scalar_select %p319, %s314, 15
      %s321 = smul.addr %s318, 16
      %s322 = sadd.s32 %s320, %s321
      %s323 = smul.addr %s316, 64
      %s324 = sadd.s32 %s322, %s323
      %s325 = smul.addr %s324, 8
      %s326 = scalar_lea.vmem %s5, %s325
      %s327 = smul.u32 16, %s24
      %s328 = smul.u32 16, %s24
      %p329 = scmp.lt.s32.totalorder %s23, 1
      %s330 = scalar_select %p329, %s23, 1
      %p331 = scmp.lt.s32.totalorder %s25, 3
      %s332 = scalar_select %p331, %s25, 3
      %p333 = scmp.lt.s32.totalorder %s328, 15
      %s334 = scalar_select %p333, %s328, 15
      %s335 = smul.addr %s332, 16
      %s336 = sadd.s32 %s334, %s335
      %s337 = smul.addr %s330, 64
      %s338 = sadd.s32 %s336, %s337
      %s339 = smul.addr %s338, 8
      %s340 = scalar_lea.vmem %s6, %s339
      %s341 = smul.u32 16, %s24
      %p342 = scmp.eq.s32.totalorder %s25, 0
      // Predicated region
      $region41: #{tpu_custom_call.1} parent=39 // pred_check
        %p343 = pneg %p342
      $region42: #{tpu_custom_call.1} parent=39 // pred_check_branch
        %345 = sbr.rel (%p343) target = $region44
      $region43: #{tpu_custom_call.1} parent=39 // pred_region
        %v346 = vld [vmem:[%s312] sm:$0xff]
        %v347 = vld [vmem:[%s312 + $0x8] sm:$0xff]
        %v348 = vld [vmem:[%s312 + $0x10] sm:$0xff]
        %v349 = vld [vmem:[%s312 + $0x18] sm:$0xff]
        %v350 = vld [vmem:[%s312 + $0x20] sm:$0xff]
        %v351 = vld [vmem:[%s312 + $0x28] sm:$0xff]
        %v352 = vld [vmem:[%s312 + $0x30] sm:$0xff]
        %v353 = vld [vmem:[%s312 + $0x38] sm:$0xff]
        %v354 = vld [vmem:[%s312 + $0x40] sm:$0xff]
        %v355 = vld [vmem:[%s312 + $0x48] sm:$0xff]
        %v356 = vld [vmem:[%s312 + $0x50] sm:$0xff]
        %v357 = vld [vmem:[%s312 + $0x58] sm:$0xff]
        %v358 = vld [vmem:[%s312 + $0x60] sm:$0xff]
        %v359 = vld [vmem:[%s312 + $0x68] sm:$0xff]
        %v360 = vld [vmem:[%s312 + $0x70] sm:$0xff]
        %v361 = vld [vmem:[%s312 + $0x78] sm:$0xff]
        %v362 = vld [vmem:[%s1] sm:$0x1]
        %v363 = vld [vmem:[%s2] sm:$0x1]
        %vm364 = vcmask 261120
        %v365 = vsel %vm364, %v346, 0.0
        %366 = vadd.xlane.f32.xlu0 %v365
        %v367 = vpop.xlane.xlu0 %366
        %v368 = vsel %vm364, %v347, 0.0
        %369 = vadd.xlane.f32.xlu0 %v368
        %v370 = vpop.xlane.xlu0 %369
        %v371 = vsel %vm364, %v348, 0.0
        %372 = vadd.xlane.f32.xlu0 %v371
        %v373 = vpop.xlane.xlu0 %372
        %v374 = vsel %vm364, %v349, 0.0
        %375 = vadd.xlane.f32.xlu0 %v374
        %v376 = vpop.xlane.xlu0 %375
        %v377 = vsel %vm364, %v350, 0.0
        %378 = vadd.xlane.f32.xlu0 %v377
        %v379 = vpop.xlane.xlu0 %378
        %v380 = vsel %vm364, %v351, 0.0
        %381 = vadd.xlane.f32.xlu0 %v380
        %v382 = vpop.xlane.xlu0 %381
        %v383 = vsel %vm364, %v352, 0.0
        %384 = vadd.xlane.f32.xlu0 %v383
        %v385 = vpop.xlane.xlu0 %384
        %v386 = vsel %vm364, %v353, 0.0
        %387 = vadd.xlane.f32.xlu0 %v386
        %v388 = vpop.xlane.xlu0 %387
        %v389 = vsel %vm364, %v354, 0.0
        %390 = vadd.xlane.f32.xlu0 %v389
        %v391 = vpop.xlane.xlu0 %390
        %v392 = vsel %vm364, %v355, 0.0
        %393 = vadd.xlane.f32.xlu0 %v392
        %v394 = vpop.xlane.xlu0 %393
        %v395 = vsel %vm364, %v356, 0.0
        %396 = vadd.xlane.f32.xlu0 %v395
        %v397 = vpop.xlane.xlu0 %396
        %v398 = vsel %vm364, %v357, 0.0
        %399 = vadd.xlane.f32.xlu0 %v398
        %v400 = vpop.xlane.xlu0 %399
        %v401 = vsel %vm364, %v358, 0.0
        %402 = vadd.xlane.f32.xlu0 %v401
        %v403 = vpop.xlane.xlu0 %402
        %v404 = vsel %vm364, %v359, 0.0
        %405 = vadd.xlane.f32.xlu0 %v404
        %v406 = vpop.xlane.xlu0 %405
        %v407 = vsel %vm364, %v360, 0.0
        %408 = vadd.xlane.f32.xlu0 %v407
        %v409 = vpop.xlane.xlu0 %408
        %v410 = vsel %vm364, %v361, 0.0
        %411 = vadd.xlane.f32.xlu0 %v410
        %v412 = vpop.xlane.xlu0 %411
        %v413 = vrcp.pop 32.0
        %v414 = vmul.f32 %v367, %v413
        %v415 = vmul.f32 %v370, %v413
        %v416 = vmul.f32 %v373, %v413
        %v417 = vmul.f32 %v376, %v413
        %v418 = vmul.f32 %v379, %v413
        %v419 = vmul.f32 %v382, %v413
        %v420 = vmul.f32 %v385, %v413
        %v421 = vmul.f32 %v388, %v413
        %v422 = vmul.f32 %v391, %v413
        %v423 = vmul.f32 %v394, %v413
        %v424 = vmul.f32 %v397, %v413
        %v425 = vmul.f32 %v400, %v413
        %v426 = vmul.f32 %v403, %v413
        %v427 = vmul.f32 %v406, %v413
        %v428 = vmul.f32 %v409, %v413
        %v429 = vmul.f32 %v412, %v413
        %v430 = vsub.f32 %v346, %v414
        %v431 = vsub.f32 %v347, %v415
        %v432 = vsub.f32 %v348, %v416
        %v433 = vsub.f32 %v349, %v417
        %v434 = vsub.f32 %v350, %v418
        %v435 = vsub.f32 %v351, %v419
        %v436 = vsub.f32 %v352, %v420
        %v437 = vsub.f32 %v353, %v421
        %v438 = vsub.f32 %v354, %v422
        %v439 = vsub.f32 %v355, %v423
        %v440 = vsub.f32 %v356, %v424
        %v441 = vsub.f32 %v357, %v425
        %v442 = vsub.f32 %v358, %v426
        %v443 = vsub.f32 %v359, %v427
        %v444 = vsub.f32 %v360, %v428
        %v445 = vsub.f32 %v361, %v429
        %v446 = vmul.f32 %v430, %v430
        %v447 = vmul.f32 %v431, %v431
        %v448 = vmul.f32 %v432, %v432
        %v449 = vmul.f32 %v433, %v433
        %v450 = vmul.f32 %v434, %v434
        %v451 = vmul.f32 %v435, %v435
        %v452 = vmul.f32 %v436, %v436
        %v453 = vmul.f32 %v437, %v437
        %v454 = vmul.f32 %v438, %v438
        %v455 = vmul.f32 %v439, %v439
        %v456 = vmul.f32 %v440, %v440
        %v457 = vmul.f32 %v441, %v441
        %v458 = vmul.f32 %v442, %v442
        %v459 = vmul.f32 %v443, %v443
        %v460 = vmul.f32 %v444, %v444
        %v461 = vmul.f32 %v445, %v445
        %v462 = vsel %vm364, %v446, 0.0
        %463 = vadd.xlane.f32.xlu0 %v462
        %v464 = vpop.xlane.xlu0 %463
        %v465 = vsel %vm364, %v447, 0.0
        %466 = vadd.xlane.f32.xlu0 %v465
        %v467 = vpop.xlane.xlu0 %466
        %v468 = vsel %vm364, %v448, 0.0
        %469 = vadd.xlane.f32.xlu0 %v468
        %v470 = vpop.xlane.xlu0 %469
        %v471 = vsel %vm364, %v449, 0.0
        %472 = vadd.xlane.f32.xlu0 %v471
        %v473 = vpop.xlane.xlu0 %472
        %v474 = vsel %vm364, %v450, 0.0
        %475 = vadd.xlane.f32.xlu0 %v474
        %v476 = vpop.xlane.xlu0 %475
        %v477 = vsel %vm364, %v451, 0.0
        %478 = vadd.xlane.f32.xlu0 %v477
        %v479 = vpop.xlane.xlu0 %478
        %v480 = vsel %vm364, %v452, 0.0
        %481 = vadd.xlane.f32.xlu0 %v480
        %v482 = vpop.xlane.xlu0 %481
        %v483 = vsel %vm364, %v453, 0.0
        %484 = vadd.xlane.f32.xlu0 %v483
        %v485 = vpop.xlane.xlu0 %484
        %v486 = vsel %vm364, %v454, 0.0
        %487 = vadd.xlane.f32.xlu0 %v486
        %v488 = vpop.xlane.xlu0 %487
        %v489 = vsel %vm364, %v455, 0.0
        %490 = vadd.xlane.f32.xlu0 %v489
        %v491 = vpop.xlane.xlu0 %490
        %v492 = vsel %vm364, %v456, 0.0
        %493 = vadd.xlane.f32.xlu0 %v492
        %v494 = vpop.xlane.xlu0 %493
        %v495 = vsel %vm364, %v457, 0.0
        %496 = vadd.xlane.f32.xlu0 %v495
        %v497 = vpop.xlane.xlu0 %496
        %v498 = vsel %vm364, %v458, 0.0
        %499 = vadd.xlane.f32.xlu0 %v498
        %v500 = vpop.xlane.xlu0 %499
        %v501 = vsel %vm364, %v459, 0.0
        %502 = vadd.xlane.f32.xlu0 %v501
        %v503 = vpop.xlane.xlu0 %502
        %v504 = vsel %vm364, %v460, 0.0
        %505 = vadd.xlane.f32.xlu0 %v504
        %v506 = vpop.xlane.xlu0 %505
        %v507 = vsel %vm364, %v461, 0.0
        %508 = vadd.xlane.f32.xlu0 %v507
        %v509 = vpop.xlane.xlu0 %508
        %v510 = vmul.f32 %v464, %v413
        %v511 = vmul.f32 %v467, %v413
        %v512 = vmul.f32 %v470, %v413
        %v513 = vmul.f32 %v473, %v413
        %v514 = vmul.f32 %v476, %v413
        %v515 = vmul.f32 %v479, %v413
        %v516 = vmul.f32 %v482, %v413
        %v517 = vmul.f32 %v485, %v413
        %v518 = vmul.f32 %v488, %v413
        %v519 = vmul.f32 %v491, %v413
        %v520 = vmul.f32 %v494, %v413
        %v521 = vmul.f32 %v497, %v413
        %v522 = vmul.f32 %v500, %v413
        %v523 = vmul.f32 %v503, %v413
        %v524 = vmul.f32 %v506, %v413
        %v525 = vmul.f32 %v509, %v413
        %v526 = vadd.f32 %v510, 1e-05
        %v527 = vadd.f32 %v511, 1e-05
        %v528 = vadd.f32 %v512, 1e-05
        %v529 = vadd.f32 %v513, 1e-05
        %v530 = vadd.f32 %v514, 1e-05
        %v531 = vadd.f32 %v515, 1e-05
        %v532 = vadd.f32 %v516, 1e-05
        %v533 = vadd.f32 %v517, 1e-05
        %v534 = vadd.f32 %v518, 1e-05
        %v535 = vadd.f32 %v519, 1e-05
        %v536 = vadd.f32 %v520, 1e-05
        %v537 = vadd.f32 %v521, 1e-05
        %v538 = vadd.f32 %v522, 1e-05
        %v539 = vadd.f32 %v523, 1e-05
        %v540 = vadd.f32 %v524, 1e-05
        %v541 = vadd.f32 %v525, 1e-05
        %v542 = vrsqrt.pop %v526
        %v543 = vrsqrt.pop %v527
        %v544 = vrsqrt.pop %v528
        %v545 = vrsqrt.pop %v529
        %v546 = vrsqrt.pop %v530
        %v547 = vrsqrt.pop %v531
        %v548 = vrsqrt.pop %v532
        %v549 = vrsqrt.pop %v533
        %v550 = vrsqrt.pop %v534
        %v551 = vrsqrt.pop %v535
        %v552 = vrsqrt.pop %v536
        %v553 = vrsqrt.pop %v537
        %v554 = vrsqrt.pop %v538
        %v555 = vrsqrt.pop %v539
        %v556 = vrsqrt.pop %v540
        %v557 = vrsqrt.pop %v541
        %v558 = vmul.f32 %v430, %v542
        %v559 = vmul.f32 %v431, %v543
        %v560 = vmul.f32 %v432, %v544
        %v561 = vmul.f32 %v433, %v545
        %v562 = vmul.f32 %v434, %v546
        %v563 = vmul.f32 %v435, %v547
        %v564 = vmul.f32 %v436, %v548
        %v565 = vmul.f32 %v437, %v549
        %v566 = vmul.f32 %v438, %v550
        %v567 = vmul.f32 %v439, %v551
        %v568 = vmul.f32 %v440, %v552
        %v569 = vmul.f32 %v441, %v553
        %v570 = vmul.f32 %v442, %v554
        %v571 = vmul.f32 %v443, %v555
        %v572 = vmul.f32 %v444, %v556
        %v573 = vmul.f32 %v445, %v557
        %v575 = vlaneseq
        %v576 = vshrl.u32 %v575, 7
        %v577 = vsub.s32 0, %v576
        %v578 = vrot.slane %v362, %v577
        %v580 = vmul.f32 %v558, %v578
        %v581 = vmul.f32 %v559, %v578
        %v582 = vmul.f32 %v560, %v578
        %v583 = vmul.f32 %v561, %v578
        %v584 = vmul.f32 %v562, %v578
        %v585 = vmul.f32 %v563, %v578
        %v586 = vmul.f32 %v564, %v578
        %v587 = vmul.f32 %v565, %v578
        %v588 = vmul.f32 %v566, %v578
        %v589 = vmul.f32 %v567, %v578
        %v590 = vmul.f32 %v568, %v578
        %v591 = vmul.f32 %v569, %v578
        %v592 = vmul.f32 %v570, %v578
        %v593 = vmul.f32 %v571, %v578
        %v594 = vmul.f32 %v572, %v578
        %v595 = vmul.f32 %v573, %v578
        %v597 = vlaneseq
        %v598 = vshrl.u32 %v597, 7
        %v599 = vsub.s32 0, %v598
        %v600 = vrot.slane %v363, %v599
        %v602 = vadd.f32 %v580, %v600
        %v603 = vadd.f32 %v581, %v600
        %v604 = vadd.f32 %v582, %v600
        %v605 = vadd.f32 %v583, %v600
        %v606 = vadd.f32 %v584, %v600
        %v607 = vadd.f32 %v585, %v600
        %v608 = vadd.f32 %v586, %v600
        %v609 = vadd.f32 %v587, %v600
        %v610 = vadd.f32 %v588, %v600
        %v611 = vadd.f32 %v589, %v600
        %v612 = vadd.f32 %v590, %v600
        %v613 = vadd.f32 %v591, %v600
        %v614 = vadd.f32 %v592, %v600
        %v615 = vadd.f32 %v593, %v600
        %v616 = vadd.f32 %v594, %v600
        %v617 = vadd.f32 %v595, %v600
        %618 = vst.msk [vmem:[#allocation2] sm:$0xff] %vm364, %v602
        %619 = vst.msk [vmem:[#allocation2 + $0x8] sm:$0xff] %vm364, %v603
        %620 = vst.msk [vmem:[#allocation2 + $0x10] sm:$0xff] %vm364, %v604
        %621 = vst.msk [vmem:[#allocation2 + $0x18] sm:$0xff] %vm364, %v605
        %622 = vst.msk [vmem:[#allocation2 + $0x20] sm:$0xff] %vm364, %v606
        %623 = vst.msk [vmem:[#allocation2 + $0x28] sm:$0xff] %vm364, %v607
        %624 = vst.msk [vmem:[#allocation2 + $0x30] sm:$0xff] %vm364, %v608
        %625 = vst.msk [vmem:[#allocation2 + $0x38] sm:$0xff] %vm364, %v609
        %626 = vst.msk [vmem:[#allocation2 + $0x40] sm:$0xff] %vm364, %v610
        %627 = vst.msk [vmem:[#allocation2 + $0x48] sm:$0xff] %vm364, %v611
        %628 = vst.msk [vmem:[#allocation2 + $0x50] sm:$0xff] %vm364, %v612
        %629 = vst.msk [vmem:[#allocation2 + $0x58] sm:$0xff] %vm364, %v613
        %630 = vst.msk [vmem:[#allocation2 + $0x60] sm:$0xff] %vm364, %v614
        %631 = vst.msk [vmem:[#allocation2 + $0x68] sm:$0xff] %vm364, %v615
        %632 = vst.msk [vmem:[#allocation2 + $0x70] sm:$0xff] %vm364, %v616
        %633 = vst.msk [vmem:[#allocation2 + $0x78] sm:$0xff] %vm364, %v617
      $region44: #{tpu_custom_call.1} parent=39 // pred_fallthru
        _
      %v634 = vld [vmem:[#allocation2] sm:$0xff]
      %v635 = vld [vmem:[#allocation2 + $0x8] sm:$0xff]
      %v636 = vld [vmem:[#allocation2 + $0x10] sm:$0xff]
      %v637 = vld [vmem:[#allocation2 + $0x18] sm:$0xff]
      %v638 = vld [vmem:[#allocation2 + $0x20] sm:$0xff]
      %v639 = vld [vmem:[#allocation2 + $0x28] sm:$0xff]
      %v640 = vld [vmem:[#allocation2 + $0x30] sm:$0xff]
      %v641 = vld [vmem:[#allocation2 + $0x38] sm:$0xff]
      %v642 = vld [vmem:[#allocation2 + $0x40] sm:$0xff]
      %v643 = vld [vmem:[#allocation2 + $0x48] sm:$0xff]
      %v644 = vld [vmem:[#allocation2 + $0x50] sm:$0xff]
      %v645 = vld [vmem:[#allocation2 + $0x58] sm:$0xff]
      %v646 = vld [vmem:[#allocation2 + $0x60] sm:$0xff]
      %v647 = vld [vmem:[#allocation2 + $0x68] sm:$0xff]
      %v648 = vld [vmem:[#allocation2 + $0x70] sm:$0xff]
      %v649 = vld [vmem:[#allocation2 + $0x78] sm:$0xff]
      %s650 = smul.u32 %s25, 32
      %s651 = scalar_lea.vmem %s3, %s650
      %v652 = vld [vmem:[%s651] sm:$0xff]
      %v653 = vld [vmem:[%s651 + $0x8] sm:$0xff]
      %v654 = vld [vmem:[%s651 + $0x10] sm:$0xff]
      %v655 = vld [vmem:[%s651 + $0x18] sm:$0xff]
      %vm656 = vcmask 261120
      %v658 = vsel %vm656, %v634, 0
      %v661 = vsel %vm656, %v635, 0
      %v664 = vsel %vm656, %v636, 0
      %v667 = vsel %vm656, %v637, 0
      %v670 = vsel %vm656, %v638, 0
      %v673 = vsel %vm656, %v639, 0
      %v676 = vsel %vm656, %v640, 0
      %v679 = vsel %vm656, %v641, 0
      %v682 = vsel %vm656, %v642, 0
      %v685 = vsel %vm656, %v643, 0
      %v688 = vsel %vm656, %v644, 0
      %v691 = vsel %vm656, %v645, 0
      %v694 = vsel %vm656, %v646, 0
      %v697 = vsel %vm656, %v647, 0
      %v700 = vsel %vm656, %v648, 0
      %v703 = vsel %vm656, %v649, 0
      %705 = vmatprep.subr.mxu0 0.0
      %706 = vmatpush1.msra.mxu0 %v652
      %707 = vmatprep.subr.mxu0 0.0
      %708 = vmatpush1.msra.mxu0 %v653
      %709 = vmatprep.subr.mxu0 0.0
      %710 = vmatpush1.msra.mxu0 %v654
      %711 = vmatprep.subr.mxu0 0.0
      %712 = vmatpush1.msra.mxu0 %v655
      %713 = vmatprep.subr.mxu0 0.0
      %714 = vmatpush1.msra.mxu0 0.0
      %715 = vmatprep.subr.mxu0 0.0
      %716 = vmatpush1.msra.mxu0 0.0
      %717 = vmatprep.subr.mxu0 0.0
      %718 = vmatpush1.msra.mxu0 0.0
      %719 = vmatprep.subr.mxu0 0.0
      %720 = vmatpush1.msra.mxu0 0.0
      %721 = vmatprep.subr.mxu0 0.0
      %722 = vmatpush1.msra.mxu0 0.0
      %723 = vmatprep.subr.mxu0 0.0
      %724 = vmatpush1.msra.mxu0 0.0
      %725 = vmatprep.subr.mxu0 0.0
      %726 = vmatpush1.msra.mxu0 0.0
      %727 = vmatprep.subr.mxu0 0.0
      %728 = vmatpush1.msra.mxu0 0.0
      %729 = vmatprep.subr.mxu0 0.0
      %730 = vmatpush1.msra.mxu0 0.0
      %731 = vmatprep.subr.mxu0 0.0
      %732 = vmatpush1.msra.mxu0 0.0
      %733 = vmatprep.subr.mxu0 0.0
      %734 = vmatpush1.msra.mxu0 0.0
      %735 = vmatprep.subr.mxu0 0.0
      %736 = vmatpush1.msra.mxu0 0.0
      %737 = vmatprep.subr.mxu0 0.0
      %738 = vmatpush1.msra.mxu0 0.0
      %739 = vmatprep.subr.mxu0 0.0
      %740 = vmatpush1.msra.mxu0 0.0
      %741 = vmatprep.subr.mxu0 0.0
      %742 = vmatpush1.msra.mxu0 0.0
      %743 = vmatprep.subr.mxu0 0.0
      %744 = vmatpush1.msra.mxu0 0.0
      %745 = vmatprep.subr.mxu0 0.0
      %746 = vmatpush1.msra.mxu0 0.0
      %747 = vmatprep.subr.mxu0 0.0
      %748 = vmatpush1.msra.mxu0 0.0
      %749 = vmatprep.subr.mxu0 0.0
      %750 = vmatpush1.msra.mxu0 0.0
      %751 = vmatprep.subr.mxu0 0.0
      %752 = vmatpush1.msra.mxu0 0.0
      %753 = vmatprep.subr.mxu0 0.0
      %754 = vmatpush1.msra.mxu0 0.0
      %755 = vmatprep.subr.mxu0 0.0
      %756 = vmatpush1.msra.mxu0 0.0
      %757 = vmatprep.subr.mxu0 0.0
      %758 = vmatpush1.msra.mxu0 0.0
      %759 = vmatprep.subr.mxu0 0.0
      %760 = vmatpush1.msra.mxu0 0.0
      %761 = vmatprep.subr.mxu0 0.0
      %762 = vmatpush1.msra.mxu0 0.0
      %763 = vmatprep.subr.mxu0 0.0
      %764 = vmatpush1.msra.mxu0 0.0
      %765 = vmatprep.subr.mxu0 0.0
      %766 = vmatpush1.msra.mxu0 0.0
      %767 = vmatprep.subr.mxu0 0.0
      %768 = vmatpush1.msra.mxu0 0.0
      %769 = vmatprep.mubr.f32.mxu0 0.0
      %770 = vmatmul.mubr.f32.gmra.mrb[0].mxu0 %v658
      %v771 = vpop.f32.mrb[0].mxu0
      %v772 = vadd.f32 0.0, %v771
      %v773 = vpop.f32.mrb[0].mxu0
      %774 = vmatprep.mubr.f32.mxu0 0.0
      %775 = vmatmul.mubr.f32.gmra.mrb[0].mxu0 %v661
      %v776 = vpop.f32.mrb[0].mxu0
      %v777 = vadd.f32 0.0, %v776
      %v778 = vpop.f32.mrb[0].mxu0
      %779 = vmatprep.mubr.f32.mxu0 0.0
      %780 = vmatmul.mubr.f32.gmra.mrb[0].mxu0 %v664
      %v781 = vpop.f32.mrb[0].mxu0
      %v782 = vadd.f32 0.0, %v781
      %v783 = vpop.f32.mrb[0].mxu0
      %784 = vmatprep.mubr.f32.mxu0 0.0
      %785 = vmatmul.mubr.f32.gmra.mrb[0].mxu0 %v667
      %v786 = vpop.f32.mrb[0].mxu0
      %v787 = vadd.f32 0.0, %v786
      %v788 = vpop.f32.mrb[0].mxu0
      %789 = vmatprep.mubr.f32.mxu0 0.0
      %790 = vmatmul.mubr.f32.gmra.mrb[0].mxu0 %v670
      %v791 = vpop.f32.mrb[0].mxu0
      %v792 = vadd.f32 0.0, %v791
      %v793 = vpop.f32.mrb[0].mxu0
      %794 = vmatprep.mubr.f32.mxu0 0.0
      %795 = vmatmul.mubr.f32.gmra.mrb[0].mxu0 %v673
      %v796 = vpop.f32.mrb[0].mxu0
      %v797 = vadd.f32 0.0, %v796
      %v798 = vpop.f32.mrb[0].mxu0
      %799 = vmatprep.mubr.f32.mxu0 0.0
      %800 = vmatmul.mubr.f32.gmra.mrb[0].mxu0 %v676
      %v801 = vpop.f32.mrb[0].mxu0
      %v802 = vadd.f32 0.0, %v801
      %v803 = vpop.f32.mrb[0].mxu0
      %804 = vmatprep.mubr.f32.mxu0 0.0
      %805 = vmatmul.mubr.f32.gmra.mrb[0].mxu0 %v679
      %v806 = vpop.f32.mrb[0].mxu0
      %v807 = vadd.f32 0.0, %v806
      %v808 = vpop.f32.mrb[0].mxu0
      %809 = vmatprep.mubr.f32.mxu0 0.0
      %810 = vmatmul.mubr.f32.gmra.mrb[0].mxu0 %v682
      %v811 = vpop.f32.mrb[0].mxu0
      %v812 = vadd.f32 0.0, %v811
      %v813 = vpop.f32.mrb[0].mxu0
      %814 = vmatprep.mubr.f32.mxu0 0.0
      %815 = vmatmul.mubr.f32.gmra.mrb[0].mxu0 %v685
      %v816 = vpop.f32.mrb[0].mxu0
      %v817 = vadd.f32 0.0, %v816
      %v818 = vpop.f32.mrb[0].mxu0
      %819 = vmatprep.mubr.f32.mxu0 0.0
      %820 = vmatmul.mubr.f32.gmra.mrb[0].mxu0 %v688
      %v821 = vpop.f32.mrb[0].mxu0
      %v822 = vadd.f32 0.0, %v821
      %v823 = vpop.f32.mrb[0].mxu0
      %824 = vmatprep.mubr.f32.mxu0 0.0
      %825 = vmatmul.mubr.f32.gmra.mrb[0].mxu0 %v691
      %v826 = vpop.f32.mrb[0].mxu0
      %v827 = vadd.f32 0.0, %v826
      %v828 = vpop.f32.mrb[0].mxu0
      %829 = vmatprep.mubr.f32.mxu0 0.0
      %830 = vmatmul.mubr.f32.gmra.mrb[0].mxu0 %v694
      %v831 = vpop.f32.mrb[0].mxu0
      %v832 = vadd.f32 0.0, %v831
      %v833 = vpop.f32.mrb[0].mxu0
      %834 = vmatprep.mubr.f32.mxu0 0.0
      %835 = vmatmul.mubr.f32.gmra.mrb[0].mxu0 %v697
      %v836 = vpop.f32.mrb[0].mxu0
      %v837 = vadd.f32 0.0, %v836
      %v838 = vpop.f32.mrb[0].mxu0
      %839 = vmatprep.mubr.f32.mxu0 0.0
      %840 = vmatmul.mubr.f32.gmra.mrb[0].mxu0 %v700
      %v841 = vpop.f32.mrb[0].mxu0
      %v842 = vadd.f32 0.0, %v841
      %v843 = vpop.f32.mrb[0].mxu0
      %844 = vmatprep.mubr.f32.mxu0 0.0
      %845 = vmatmul.mubr.f32.gmra.mrb[0].mxu0 %v703
      %v846 = vpop.f32.mrb[0].mxu0
      %v847 = vadd.f32 0.0, %v846
      %v848 = vpop.f32.mrb[0].mxu0
      %849 = vdwg.mxu0
      %vm850 = vcmask 64512
      %851 = vst.msk [vmem:[%s326] sm:$0xff] %vm850, %v772
      %852 = vst.msk [vmem:[%s326 + $0x8] sm:$0xff] %vm850, %v777
      %853 = vst.msk [vmem:[%s326 + $0x10] sm:$0xff] %vm850, %v782
      %854 = vst.msk [vmem:[%s326 + $0x18] sm:$0xff] %vm850, %v787
      %855 = vst.msk [vmem:[%s326 + $0x20] sm:$0xff] %vm850, %v792
      %856 = vst.msk [vmem:[%s326 + $0x28] sm:$0xff] %vm850, %v797
      %857 = vst.msk [vmem:[%s326 + $0x30] sm:$0xff] %vm850, %v802
      %858 = vst.msk [vmem:[%s326 + $0x38] sm:$0xff] %vm850, %v807
      %859 = vst.msk [vmem:[%s326 + $0x40] sm:$0xff] %vm850, %v812
      %860 = vst.msk [vmem:[%s326 + $0x48] sm:$0xff] %vm850, %v817
      %861 = vst.msk [vmem:[%s326 + $0x50] sm:$0xff] %vm850, %v822
      %862 = vst.msk [vmem:[%s326 + $0x58] sm:$0xff] %vm850, %v827
      %863 = vst.msk [vmem:[%s326 + $0x60] sm:$0xff] %vm850, %v832
      %864 = vst.msk [vmem:[%s326 + $0x68] sm:$0xff] %vm850, %v837
      %865 = vst.msk [vmem:[%s326 + $0x70] sm:$0xff] %vm850, %v842
      %866 = vst.msk [vmem:[%s326 + $0x78] sm:$0xff] %vm850, %v847
      %s867 = scalar_lea.vmem %s4, %s650
      %v868 = vld [vmem:[%s867] sm:$0xff]
      %v869 = vld [vmem:[%s867 + $0x8] sm:$0xff]
      %v870 = vld [vmem:[%s867 + $0x10] sm:$0xff]
      %v871 = vld [vmem:[%s867 + $0x18] sm:$0xff]
      %872 = vmatprep.subr.mxu0 0.0
      %873 = vmatpush1.msra.mxu0 %v868
      %874 = vmatprep.subr.mxu0 0.0
      %875 = vmatpush1.msra.mxu0 %v869
      %876 = vmatprep.subr.mxu0 0.0
      %877 = vmatpush1.msra.mxu0 %v870
      %878 = vmatprep.subr.mxu0 0.0
      %879 = vmatpush1.msra.mxu0 %v871
      %880 = vmatprep.subr.mxu0 0.0
      %881 = vmatpush1.msra.mxu0 0.0
      %882 = vmatprep.subr.mxu0 0.0
      %883 = vmatpush1.msra.mxu0 0.0
      %884 = vmatprep.subr.mxu0 0.0
      %885 = vmatpush1.msra.mxu0 0.0
      %886 = vmatprep.subr.mxu0 0.0
      %887 = vmatpush1.msra.mxu0 0.0
      %888 = vmatprep.subr.mxu0 0.0
      %889 = vmatpush1.msra.mxu0 0.0
      %890 = vmatprep.subr.mxu0 0.0
      %891 = vmatpush1.msra.mxu0 0.0
      %892 = vmatprep.subr.mxu0 0.0
      %893 = vmatpush1.msra.mxu0 0.0
      %894 = vmatprep.subr.mxu0 0.0
      %895 = vmatpush1.msra.mxu0 0.0
      %896 = vmatprep.subr.mxu0 0.0
      %897 = vmatpush1.msra.mxu0 0.0
      %898 = vmatprep.subr.mxu0 0.0
      %899 = vmatpush1.msra.mxu0 0.0
      %900 = vmatprep.subr.mxu0 0.0
      %901 = vmatpush1.msra.mxu0 0.0
      %902 = vmatprep.subr.mxu0 0.0
      %903 = vmatpush1.msra.mxu0 0.0
      %904 = vmatprep.subr.mxu0 0.0
      %905 = vmatpush1.msra.mxu0 0.0
      %906 = vmatprep.subr.mxu0 0.0
      %907 = vmatpush1.msra.mxu0 0.0
      %908 = vmatprep.subr.mxu0 0.0
      %909 = vmatpush1.msra.mxu0 0.0
      %910 = vmatprep.subr.mxu0 0.0
      %911 = vmatpush1.msra.mxu0 0.0
      %912 = vmatprep.subr.mxu0 0.0
      %913 = vmatpush1.msra.mxu0 0.0
      %914 = vmatprep.subr.mxu0 0.0
      %915 = vmatpush1.msra.mxu0 0.0
      %916 = vmatprep.subr.mxu0 0.0
      %917 = vmatpush1.msra.mxu0 0.0
      %918 = vmatprep.subr.mxu0 0.0
      %919 = vmatpush1.msra.mxu0 0.0
      %920 = vmatprep.subr.mxu0 0.0
      %921 = vmatpush1.msra.mxu0 0.0
      %922 = vmatprep.subr.mxu0 0.0
      %923 = vmatpush1.msra.mxu0 0.0
      %924 = vmatprep.subr.mxu0 0.0
      %925 = vmatpush1.msra.mxu0 0.0
      %926 = vmatprep.subr.mxu0 0.0
      %927 = vmatpush1.msra.mxu0 0.0
      %928 = vmatprep.subr.mxu0 0.0
      %929 = vmatpush1.msra.mxu0 0.0
      %930 = vmatprep.subr.mxu0 0.0
      %931 = vmatpush1.msra.mxu0 0.0
      %932 = vmatprep.subr.mxu0 0.0
      %933 = vmatpush1.msra.mxu0 0.0
      %934 = vmatprep.subr.mxu0 0.0
      %935 = vmatpush1.msra.mxu0 0.0
      %936 = vmatprep.mubr.f32.mxu0 0.0
      %937 = vmatmul.mubr.f32.gmra.mrb[0].mxu0 %v658
      %v938 = vpop.f32.mrb[0].mxu0
      %v939 = vadd.f32 0.0, %v938
      %v940 = vpop.f32.mrb[0].mxu0
      %941 = vmatprep.mubr.f32.mxu0 0.0
      %942 = vmatmul.mubr.f32.gmra.mrb[0].mxu0 %v661
      %v943 = vpop.f32.mrb[0].mxu0
      %v944 = vadd.f32 0.0, %v943
      %v945 = vpop.f32.mrb[0].mxu0
      %946 = vmatprep.mubr.f32.mxu0 0.0
      %947 = vmatmul.mubr.f32.gmra.mrb[0].mxu0 %v664
      %v948 = vpop.f32.mrb[0].mxu0
      %v949 = vadd.f32 0.0, %v948
      %v950 = vpop.f32.mrb[0].mxu0
      %951 = vmatprep.mubr.f32.mxu0 0.0
      %952 = vmatmul.mubr.f32.gmra.mrb[0].mxu0 %v667
      %v953 = vpop.f32.mrb[0].mxu0
      %v954 = vadd.f32 0.0, %v953
      %v955 = vpop.f32.mrb[0].mxu0
      %956 = vmatprep.mubr.f32.mxu0 0.0
      %957 = vmatmul.mubr.f32.gmra.mrb[0].mxu0 %v670
      %v958 = vpop.f32.mrb[0].mxu0
      %v959 = vadd.f32 0.0, %v958
      %v960 = vpop.f32.mrb[0].mxu0
      %961 = vmatprep.mubr.f32.mxu0 0.0
      %962 = vmatmul.mubr.f32.gmra.mrb[0].mxu0 %v673
      %v963 = vpop.f32.mrb[0].mxu0
      %v964 = vadd.f32 0.0, %v963
      %v965 = vpop.f32.mrb[0].mxu0
      %966 = vmatprep.mubr.f32.mxu0 0.0
      %967 = vmatmul.mubr.f32.gmra.mrb[0].mxu0 %v676
      %v968 = vpop.f32.mrb[0].mxu0
      %v969 = vadd.f32 0.0, %v968
      %v970 = vpop.f32.mrb[0].mxu0
      %971 = vmatprep.mubr.f32.mxu0 0.0
      %972 = vmatmul.mubr.f32.gmra.mrb[0].mxu0 %v679
      %v973 = vpop.f32.mrb[0].mxu0
      %v974 = vadd.f32 0.0, %v973
      %v975 = vpop.f32.mrb[0].mxu0
      %976 = vmatprep.mubr.f32.mxu0 0.0
      %977 = vmatmul.mubr.f32.gmra.mrb[0].mxu0 %v682
      %v978 = vpop.f32.mrb[0].mxu0
      %v979 = vadd.f32 0.0, %v978
      %v980 = vpop.f32.mrb[0].mxu0
      %981 = vmatprep.mubr.f32.mxu0 0.0
      %982 = vmatmul.mubr.f32.gmra.mrb[0].mxu0 %v685
      %v983 = vpop.f32.mrb[0].mxu0
      %v984 = vadd.f32 0.0, %v983
      %v985 = vpop.f32.mrb[0].mxu0
      %986 = vmatprep.mubr.f32.mxu0 0.0
      %987 = vmatmul.mubr.f32.gmra.mrb[0].mxu0 %v688
      %v988 = vpop.f32.mrb[0].mxu0
      %v989 = vadd.f32 0.0, %v988
      %v990 = vpop.f32.mrb[0].mxu0
      %991 = vmatprep.mubr.f32.mxu0 0.0
      %992 = vmatmul.mubr.f32.gmra.mrb[0].mxu0 %v691
      %v993 = vpop.f32.mrb[0].mxu0
      %v994 = vadd.f32 0.0, %v993
      %v995 = vpop.f32.mrb[0].mxu0
      %996 = vmatprep.mubr.f32.mxu0 0.0
      %997 = vmatmul.mubr.f32.gmra.mrb[0].mxu0 %v694
      %v998 = vpop.f32.mrb[0].mxu0
      %v999 = vadd.f32 0.0, %v998
      %v1000 = vpop.f32.mrb[0].mxu0
      %1001 = vmatprep.mubr.f32.mxu0 0.0
      %1002 = vmatmul.mubr.f32.gmra.mrb[0].mxu0 %v697
      %v1003 = vpop.f32.mrb[0].mxu0
      %v1004 = vadd.f32 0.0, %v1003
      %v1005 = vpop.f32.mrb[0].mxu0
      %1006 = vmatprep.mubr.f32.mxu0 0.0
      %1007 = vmatmul.mubr.f32.gmra.mrb[0].mxu0 %v700
      %v1008 = vpop.f32.mrb[0].mxu0
      %v1009 = vadd.f32 0.0, %v1008
      %v1010 = vpop.f32.mrb[0].mxu0
      %1011 = vmatprep.mubr.f32.mxu0 0.0
      %1012 = vmatmul.mubr.f32.gmra.mrb[0].mxu0 %v703
      %v1013 = vpop.f32.mrb[0].mxu0
      %v1014 = vadd.f32 0.0, %v1013
      %v1015 = vpop.f32.mrb[0].mxu0
      %1016 = vdwg.mxu0
      %1017 = vst.msk [vmem:[%s340] sm:$0xff] %vm850, %v939
      %1018 = vst.msk [vmem:[%s340 + $0x8] sm:$0xff] %vm850, %v944
      %1019 = vst.msk [vmem:[%s340 + $0x10] sm:$0xff] %vm850, %v949
      %1020 = vst.msk [vmem:[%s340 + $0x18] sm:$0xff] %vm850, %v954
      %1021 = vst.msk [vmem:[%s340 + $0x20] sm:$0xff] %vm850, %v959
      %1022 = vst.msk [vmem:[%s340 + $0x28] sm:$0xff] %vm850, %v964
      %1023 = vst.msk [vmem:[%s340 + $0x30] sm:$0xff] %vm850, %v969
      %1024 = vst.msk [vmem:[%s340 + $0x38] sm:$0xff] %vm850, %v974
      %1025 = vst.msk [vmem:[%s340 + $0x40] sm:$0xff] %vm850, %v979
      %1026 = vst.msk [vmem:[%s340 + $0x48] sm:$0xff] %vm850, %v984
      %1027 = vst.msk [vmem:[%s340 + $0x50] sm:$0xff] %vm850, %v989
      %1028 = vst.msk [vmem:[%s340 + $0x58] sm:$0xff] %vm850, %v994
      %1029 = vst.msk [vmem:[%s340 + $0x60] sm:$0xff] %vm850, %v999
      %1030 = vst.msk [vmem:[%s340 + $0x68] sm:$0xff] %vm850, %v1004
      %1031 = vst.msk [vmem:[%s340 + $0x70] sm:$0xff] %vm850, %v1009
      %1032 = vst.msk [vmem:[%s340 + $0x78] sm:$0xff] %vm850, %v1014
      %s1033 = smul.u32 16, %s24
      %p1034 = scmp.lt.s32.totalorder %s23, 1
      %s1035 = scalar_select %p1034, %s23, 1
      %p1036 = scmp.lt.s32.totalorder %s25, 3
      %s1037 = scalar_select %p1036, %s25, 3
      %p1038 = scmp.lt.s32.totalorder %s1033, 15
      %s1039 = scalar_select %p1038, %s1033, 15
      %s1040 = smul.addr %s1037, 16
      %s1041 = sadd.s32 %s1039, %s1040
      %s1042 = smul.addr %s1035, 64
      %s1043 = sadd.s32 %s1041, %s1042
      %s1044 = smul.addr %s1043, 8
      %s1045 = scalar_lea.vmem %s5, %s1044
      %s1046 = smul.u32 16, %s24
      %p1047 = scmp.lt.s32.totalorder %s23, 1
      %s1048 = scalar_select %p1047, %s23, 1
      %p1049 = scmp.lt.s32.totalorder %s25, 3
      %s1050 = scalar_select %p1049, %s25, 3
      %p1051 = scmp.lt.s32.totalorder %s1046, 15
      %s1052 = scalar_select %p1051, %s1046, 15
      %s1053 = smul.addr %s1050, 16
      %s1054 = sadd.s32 %s1052, %s1053
      %s1055 = smul.addr %s1048, 64
      %s1056 = sadd.s32 %s1054, %s1055
      %s1057 = smul.addr %s1056, 8
      %s1058 = scalar_lea.vmem %s6, %s1057
      // Predicated region
      $region45: #{tpu_custom_call.1} parent=39 // pred_check
        %p1059 = pneg %p171
      $region46: #{tpu_custom_call.1} parent=39 // pred_check_branch
        %1061 = sbr.rel (%p1059) target = $region48
      $region47: #{tpu_custom_call.1} parent=39 // pred_region
        %s1062 = smul.u32 16, %s24
      $region48: #{tpu_custom_call.1} parent=39 // pred_fallthru
        _
      // Predicated region
      $region49: #{tpu_custom_call.1} parent=39 // pred_check
        %p1063 = pneg %p201
      $region50: #{tpu_custom_call.1} parent=39 // pred_check_branch
        %1065 = sbr.rel (%p1063) target = $region52
      $region51: #{tpu_custom_call.1} parent=39 // pred_region
        %s1066 = smul.u32 16, %s24
      $region52: #{tpu_custom_call.1} parent=39 // pred_fallthru
        _
    $region40: #{tpu_custom_call.1} parent=5 // pred_fallthru
      _
    %p1067 = scmp.le.s32.totalorder 2, %s13
    // Predicated region
    $region53: #{tpu_custom_call.1} parent=5 // pred_check
      %p1068 = pneg %p1067
    $region54: #{tpu_custom_call.1} parent=5 // pred_check_branch
      %1070 = sbr.rel (%p1068) target = $region56
    $region55: #{tpu_custom_call.1} parent=5 // pred_region
      %s1071 = ssub.s32 %s13, 2
      // Predicated region
      $region57: #{tpu_custom_call.1} parent=55 // pred_check
        %p1072 = pneg %p177
      $region58: #{tpu_custom_call.1} parent=55 // pred_check_branch
        %1074 = sbr.rel (%p1072) target = $region60
      $region59: #{tpu_custom_call.1} parent=55 // pred_region
        %s1075 = smul.u32 16, %s27
        %p1076 = scmp.lt.s32.totalorder %s26, 1
        %s1077 = scalar_select %p1076, %s26, 1
        %p1078 = scmp.lt.s32.totalorder %s28, 3
        %s1079 = scalar_select %p1078, %s28, 3
        %p1080 = scmp.lt.s32.totalorder %s1075, 15
        %s1081 = scalar_select %p1080, %s1075, 15
        %s1082 = smul.addr %s1079, 16
        %s1083 = sadd.s32 %s1081, %s1082
        %s1084 = smul.addr %s1077, 64
        %s1085 = sadd.s32 %s1083, %s1084
        %s1086 = smul.addr %s1085, 8
        %s1087 = scalar_lea.vmem %s5, %s1086
      $region60: #{tpu_custom_call.1} parent=55 // pred_fallthru
        _
      // Predicated region
      $region61: #{tpu_custom_call.1} parent=55 // pred_check
        %p1088 = pneg %p207
      $region62: #{tpu_custom_call.1} parent=55 // pred_check_branch
        %1090 = sbr.rel (%p1088) target = $region64
      $region63: #{tpu_custom_call.1} parent=55 // pred_region
        %s1091 = smul.u32 16, %s27
        %p1092 = scmp.lt.s32.totalorder %s26, 1
        %s1093 = scalar_select %p1092, %s26, 1
        %p1094 = scmp.lt.s32.totalorder %s28, 3
        %s1095 = scalar_select %p1094, %s28, 3
        %p1096 = scmp.lt.s32.totalorder %s1091, 15
        %s1097 = scalar_select %p1096, %s1091, 15
        %s1098 = smul.addr %s1095, 16
        %s1099 = sadd.s32 %s1097, %s1098
        %s1100 = smul.addr %s1093, 64
        %s1101 = sadd.s32 %s1099, %s1100
        %s1102 = smul.addr %s1101, 8
        %s1103 = scalar_lea.vmem %s6, %s1102
      $region64: #{tpu_custom_call.1} parent=55 // pred_fallthru
        _
    $region56: #{tpu_custom_call.1} parent=5 // pred_fallthru
      _
  $region6: #{tpu_custom_call.1} parent=0 // loop_footer
    %s17 = sadd.s32 1, %s13
  $region7: #{tpu_custom_call.1} parent=0 // loop_footer_branch
    %12 = sbr.rel target = $region3
  $region8: #{tpu_custom_call.1} parent=0 // loop_exit
    _

</llo_original>
